<compile_context>
chip_gen: v5e
topology: v5e:2x2
jax: 0.10.0
libtpu: 0.0.40
codegen_flags: <defaults>
</compile_context>

<pallas_src>
import jax
import jax.numpy as jnp
from jax.experimental import pallas as pl
from jax.experimental.pallas import tpu as pltpu

HIDDEN_DIM = 32
POOLING_DIM = 64
MLP_HEAD_DIM = 32          # != POOLING_DIM  ->  union_single_not_match = True (up_dim used)
NUM_OBJ_CLS = 16
NUM_REL_CLS = 8

POOL_PAD = 128             # pooling dim padded to a full vreg lane width
REL_PAD = 128              # rel-class dim padded -> lane-dense output stores
ROW_BLOCK = 128            # relation rows per grid step
FRQ_ROWS = NUM_OBJ_CLS * NUM_OBJ_CLS


# ------------------------------- helpers ------------------------------------

def _pad_last(x, to):
    pad = to - x.shape[-1]
    if pad <= 0:
        return x
    return jnp.pad(x, [(0, 0)] * (x.ndim - 1) + [(0, pad)])


def _pad_rows(x, to):
    pad = to - x.shape[0]
    if pad <= 0:
        return x
    return jnp.pad(x, [(0, pad)] + [(0, 0)] * (x.ndim - 1))


def _split_rows(x, sizes):
    out, start = [], 0
    for s in sizes:
        out.append(x[start:start + s])
        start += s
    return out


# ----------------------------- Pallas kernel --------------------------------

def _vctree_rel_kernel(idx_ref, edge_ctx_ref, union_ref,
                       w_pe_h_ref, w_pe_t_ref, b_pe_h_ref, b_pe_t_ref,
                       w_cat_h_ref, w_cat_t_ref, b_cat_ref,
                       w_up_ref, b_up_ref,
                       w_ctx_ref, b_ctx_ref,
                       frq_tbl_ref,
                       o_ref):
    blk = idx_ref.shape[0]
    n_obj = edge_ctx_ref.shape[0]

    # post_emb + ReLU, split into head/tail halves (edge_rep.view(N,2,H)[:,0/1]).
    # Recomputed per row-block (tiny) so the row grid carries no state -> "parallel".
    ectx = edge_ctx_ref[...]                                   # bf16 [n_obj, H]
    head = jnp.maximum(
        jnp.dot(ectx, w_pe_h_ref[...], preferred_element_type=jnp.float32)
        + b_pe_h_ref[...], 0.0).astype(jnp.bfloat16)
    tail = jnp.maximum(
        jnp.dot(ectx, w_pe_t_ref[...], preferred_element_type=jnp.float32)
        + b_pe_t_ref[...], 0.0).astype(jnp.bfloat16)

    idx = idx_ref[...]                                         # int32 [blk, 3]
    sub = idx[:, 0:1]
    obj = idx[:, 1:2]
    frq = idx[:, 2:3]

    # In-kernel row gather via exact one-hot matmuls (MXU friendly).
    obj_iota = jax.lax.broadcasted_iota(jnp.int32, (blk, n_obj), 1)
    oneh_sub = jnp.where(obj_iota == sub, 1.0, 0.0).astype(jnp.bfloat16)
    oneh_obj = jnp.where(obj_iota == obj, 1.0, 0.0).astype(jnp.bfloat16)
    head_g = jnp.dot(oneh_sub, head,
                     preferred_element_type=jnp.float32).astype(jnp.bfloat16)
    tail_g = jnp.dot(oneh_obj, tail,
                     preferred_element_type=jnp.float32).astype(jnp.bfloat16)

    # post_cat split into head/tail halves:  cat(h, t) @ Wcat == h @ Wh + t @ Wt
    prod_rep = (jnp.dot(head_g, w_cat_h_ref[...], preferred_element_type=jnp.float32)
                + jnp.dot(tail_g, w_cat_t_ref[...], preferred_element_type=jnp.float32)
                + b_cat_ref[...])                              # f32 [blk, POOL_PAD]

    # union_features = up_dim(union_features)   (union_single_not_match == True)
    union = (jnp.dot(union_ref[...], w_up_ref[...], preferred_element_type=jnp.float32)
             + b_up_ref[...])                                  # f32 [blk, POOL_PAD]

    # ctx_dists = ctx_compress(prod_rep * union_features)
    ctx = (jnp.dot((prod_rep * union).astype(jnp.bfloat16), w_ctx_ref[...],
                   preferred_element_type=jnp.float32) + b_ctx_ref[...])

    # frequency-bias lookup in-kernel (tiny VMEM-resident table, one-hot matmul)
    frq_iota = jax.lax.broadcasted_iota(jnp.int32, (blk, frq_tbl_ref.shape[0]), 1)
    oneh_frq = jnp.where(frq_iota == frq, 1.0, 0.0)            # f32 [blk, 256]
    frq_rows = jnp.dot(oneh_frq, frq_tbl_ref[...],
                       preferred_element_type=jnp.float32)

    o_ref[...] = ctx + frq_rows                                # f32 [blk, REL_PAD]


# ------------------------- parameter preparation -----------------------------

def prepare_params(params):
    """Pad to lane-dense 128-wide layouts and cast matmul weights to bf16 (once)."""
    H = HIDDEN_DIM
    f32, bf16 = jnp.float32, jnp.bfloat16
    p = {}
    p["w_pe_h"] = params["w_post_emb"][:, :H].astype(bf16)
    p["w_pe_t"] = params["w_post_emb"][:, H:].astype(bf16)
    p["b_pe_h"] = params["b_post_emb"][:H].reshape(1, H).astype(f32)
    p["b_pe_t"] = params["b_post_emb"][H:].reshape(1, H).astype(f32)
    p["w_cat_h"] = _pad_last(params["w_post_cat"][:H], POOL_PAD).astype(bf16)
    p["w_cat_t"] = _pad_last(params["w_post_cat"][H:], POOL_PAD).astype(bf16)
    p["b_cat"] = _pad_last(params["b_post_cat"].reshape(1, -1), POOL_PAD).astype(f32)
    p["w_up"] = _pad_last(params["w_up_dim"], POOL_PAD).astype(bf16)
    p["b_up"] = _pad_last(params["b_up_dim"].reshape(1, -1), POOL_PAD).astype(f32)
    w_ctx = _pad_rows(_pad_last(params["w_ctx_compress"], REL_PAD), POOL_PAD)
    p["w_ctx"] = w_ctx.astype(bf16)
    p["b_ctx"] = _pad_last(params["b_ctx_compress"].reshape(1, -1), REL_PAD).astype(f32)
    p["frq_tbl"] = _pad_last(params["freq_bias"], REL_PAD).astype(f32)
    return p


# ------------------------------ fused call -----------------------------------

def _rel_dists_fused(pp, idx_pad, edge_ctx_pad, union_pad):
    n_rel_pad = idx_pad.shape[0]
    n_obj_pad = edge_ctx_pad.shape[0]
    grid = (n_rel_pad // ROW_BLOCK,)

    def row_spec(width):
        return pl.BlockSpec((ROW_BLOCK, width), lambda i: (i, 0))

    def resident(shape):
        return pl.BlockSpec(shape, lambda i: (0, 0))

    flops_per_row = 2 * (2 * n_obj_pad * HIDDEN_DIM
                         + 2 * HIDDEN_DIM * POOL_PAD
                         + MLP_HEAD_DIM * POOL_PAD
                         + POOL_PAD * REL_PAD
                         + FRQ_ROWS * REL_PAD)
    weight_bytes = sum(int(v.size) * (2 if v.dtype == jnp.bfloat16 else 4)
                       for v in pp.values())
    cost = pl.CostEstimate(
        flops=int(flops_per_row * n_rel_pad),
        transcendentals=0,
        bytes_accessed=int(idx_pad.size * 4 + union_pad.size * 2
                           + edge_ctx_pad.size * 2
                           + n_rel_pad * REL_PAD * 4 + weight_bytes))

    return pl.pallas_call(
        _vctree_rel_kernel,
        out_shape=jax.ShapeDtypeStruct((n_rel_pad, REL_PAD), jnp.float32),
        grid_spec=pltpu.PrefetchScalarGridSpec(
            num_scalar_prefetch=0,
            grid=grid,
            in_specs=[
                row_spec(3),                                   # idx (sub, obj, frq)
                resident((n_obj_pad, HIDDEN_DIM)),             # edge_ctx
                row_spec(MLP_HEAD_DIM),                        # union features
                resident((HIDDEN_DIM, HIDDEN_DIM)),            # w_pe_h
                resident((HIDDEN_DIM, HIDDEN_DIM)),            # w_pe_t
                resident((1, HIDDEN_DIM)),                     # b_pe_h
                resident((1, HIDDEN_DIM)),                     # b_pe_t
                resident((HIDDEN_DIM, POOL_PAD)),              # w_cat_h
                resident((HIDDEN_DIM, POOL_PAD)),              # w_cat_t
                resident((1, POOL_PAD)),                       # b_cat
                resident((MLP_HEAD_DIM, POOL_PAD)),            # w_up
                resident((1, POOL_PAD)),                       # b_up
                resident((POOL_PAD, REL_PAD)),                 # w_ctx
                resident((1, REL_PAD)),                        # b_ctx
                resident((FRQ_ROWS, REL_PAD)),                 # freq-bias table
            ],
            out_specs=pl.BlockSpec((ROW_BLOCK, REL_PAD), lambda i: (i, 0)),
        ),
        compiler_params=pltpu.CompilerParams(
            dimension_semantics=("parallel",),
            vmem_limit_bytes=32 * 1024 * 1024),
        cost_estimate=cost,
    )(idx_pad, edge_ctx_pad, union_pad,
      pp["w_pe_h"], pp["w_pe_t"], pp["b_pe_h"], pp["b_pe_t"],
      pp["w_cat_h"], pp["w_cat_t"], pp["b_cat"],
      pp["w_up"], pp["b_up"],
      pp["w_ctx"], pp["b_ctx"],
      pp["frq_tbl"])


# ------------------------------ forward glue ---------------------------------

def vctree_predictor_forward(prepared, obj_dists, obj_preds, edge_ctx,
                             rel_pair_idxs, num_objs, union_features):
    """Eval-mode VCTreePredictor.forward (post context-layer)."""
    n_obj = edge_ctx.shape[0]

    # per-image pair indices -> global indices into the concatenated objects
    offsets, acc = [], 0
    for n in num_objs:
        offsets.append(acc)
        acc += n
    glob_pairs = jnp.concatenate(
        [p.astype(jnp.int32) + jnp.int32(o) for p, o in zip(rel_pair_idxs, offsets)],
        axis=0)                                                 # [N_rel, 2]
    sub_idx = glob_pairs[:, 0]
    obj_idx = glob_pairs[:, 1]
    frq_idx = (jnp.take(obj_preds, sub_idx) * NUM_OBJ_CLS
               + jnp.take(obj_preds, obj_idx)).astype(jnp.int32)
    n_rel = glob_pairs.shape[0]

    idx = jnp.stack([sub_idx, obj_idx, frq_idx], axis=1).astype(jnp.int32)

    n_rel_pad = ((n_rel + ROW_BLOCK - 1) // ROW_BLOCK) * ROW_BLOCK
    n_obj_pad = ((n_obj + 15) // 16) * 16

    idx_pad = _pad_rows(idx, n_rel_pad)
    union_pad = _pad_rows(union_features, n_rel_pad).astype(jnp.bfloat16)
    edge_ctx_pad = _pad_rows(edge_ctx, n_obj_pad).astype(jnp.bfloat16)

    rel_full = _rel_dists_fused(prepared, idx_pad, edge_ctx_pad, union_pad)
    rel_dists = rel_full[:n_rel, :NUM_REL_CLS]

    num_rels = [int(p.shape[0]) for p in rel_pair_idxs]
    obj_splits = _split_rows(obj_dists, num_objs)
    rel_splits = _split_rows(rel_dists, num_rels)
    add_losses = {}
    return obj_splits, rel_splits, add_losses, None, None


# ------------------------------ reference ------------------------------------

def _reference_rel_dists(params, edge_ctx, obj_preds, rel_pair_idxs, num_objs,
                         union_features):
    """Pure-JAX reference mirroring the kernel's bf16-input / f32-accum matmuls."""
    H = HIDDEN_DIM
    f32, bf16 = jnp.float32, jnp.bfloat16
    w_pe = params["w_post_emb"].astype(bf16)
    edge_rep = jnp.maximum(
        jnp.dot(edge_ctx.astype(bf16), w_pe, preferred_element_type=f32)
        + params["b_post_emb"], 0.0)
    head = edge_rep[:, :H].astype(bf16)
    tail = edge_rep[:, H:].astype(bf16)
    offsets, acc = [], 0
    for n in num_objs:
        offsets.append(acc)
        acc += n
    glob = jnp.concatenate([p.astype(jnp.int32) + jnp.int32(o)
                            for p, o in zip(rel_pair_idxs, offsets)], axis=0)
    w_cat = params["w_post_cat"].astype(bf16)
    prod_rep = (jnp.dot(head[glob[:, 0]], w_cat[:H], preferred_element_type=f32)
                + jnp.dot(tail[glob[:, 1]], w_cat[H:], preferred_element_type=f32)
                + params["b_post_cat"])
    union = (jnp.dot(union_features.astype(bf16), params["w_up_dim"].astype(bf16),
                     preferred_element_type=f32) + params["b_up_dim"])
    ctx = (jnp.dot((prod_rep * union).astype(bf16),
                   params["w_ctx_compress"].astype(bf16),
                   preferred_element_type=f32) + params["b_ctx_compress"])
    frq_idx = obj_preds[glob[:, 0]] * NUM_OBJ_CLS + obj_preds[glob[:, 1]]
    return ctx + params["freq_bias"][frq_idx]


# -------------------------------- main ----------------------------------------

if __name__ == "__main__":
    key = jax.random.PRNGKey(0)
    ks = jax.random.split(key, 16)

    num_objs = [12, 12]
    num_rels = [150, 110]           # N_rel = 260 -> padded to 384 -> 3 row blocks
    n_obj = sum(num_objs)
    n_rel = sum(num_rels)

    # stand-in outputs of the VCTreeLSTMContext layer
    edge_ctx = jax.random.normal(ks[0], (n_obj, HIDDEN_DIM), dtype=jnp.float32)
    obj_dists = jax.random.normal(ks[1], (n_obj, NUM_OBJ_CLS), dtype=jnp.float32)
    obj_preds = jax.random.randint(ks[2], (n_obj,), 1, NUM_OBJ_CLS, dtype=jnp.int32)

    rel_pair_idxs = [
        jax.random.randint(ks[3], (num_rels[0], 2), 0, num_objs[0], dtype=jnp.int32),
        jax.random.randint(ks[4], (num_rels[1], 2), 0, num_objs[1], dtype=jnp.int32),
    ]
    union_features = jax.random.normal(ks[5], (n_rel, MLP_HEAD_DIM), dtype=jnp.float32)

    # deterministic synthetic parameter init (shapes match the module's __init__)
    params = {
        "w_post_emb": jax.random.normal(ks[6], (HIDDEN_DIM, 2 * HIDDEN_DIM)) * (10.0 / HIDDEN_DIM ** 0.5),
        "b_post_emb": jnp.zeros((2 * HIDDEN_DIM,), jnp.float32),
        "w_post_cat": jax.random.normal(ks[7], (2 * HIDDEN_DIM, POOLING_DIM)) * (2.0 / (2 * HIDDEN_DIM + POOLING_DIM)) ** 0.5,
        "b_post_cat": jnp.zeros((POOLING_DIM,), jnp.float32),
        "w_up_dim": jax.random.normal(ks[8], (MLP_HEAD_DIM, POOLING_DIM)) * (2.0 / (MLP_HEAD_DIM + POOLING_DIM)) ** 0.5,
        "b_up_dim": jnp.zeros((POOLING_DIM,), jnp.float32),
        "w_ctx_compress": jax.random.normal(ks[9], (POOLING_DIM, NUM_REL_CLS)) * (2.0 / (POOLING_DIM + NUM_REL_CLS)) ** 0.5,
        "b_ctx_compress": jnp.zeros((NUM_REL_CLS,), jnp.float32),
        "freq_bias": jax.random.normal(ks[10], (NUM_OBJ_CLS * NUM_OBJ_CLS, NUM_REL_CLS)) * 0.1,
    }
    params = {k: v.astype(jnp.float32) for k, v in params.items()}

    prepared = prepare_params(params)

    obj_out, rel_out, add_losses, _, _ = vctree_predictor_forward(
        prepared, obj_dists, obj_preds, edge_ctx, rel_pair_idxs, num_objs,
        union_features)
    rel_full = jnp.concatenate(rel_out, axis=0)
    jax.block_until_ready(rel_full)

    # correctness check against a pure-JAX reference (same bf16 matmul inputs)
    ref = _reference_rel_dists(params, edge_ctx, obj_preds, rel_pair_idxs, num_objs,
                               union_features)
    assert rel_full.shape == (n_rel, NUM_REL_CLS)
    assert all(o.shape == (n, NUM_OBJ_CLS) for o, n in zip(obj_out, num_objs))
    max_err = float(jnp.max(jnp.abs(rel_full - ref)))
    assert jnp.allclose(rel_full, ref, rtol=1e-2, atol=1e-2), \
        f"mismatch vs reference (max abs err {max_err})"

    print("KERNEL_OK")
</pallas_src>

<mosaic_0001>
module attributes {stable_mosaic.version = 11 : i64} {
  func.func @_vctree_rel_kernel(%arg0: i32, %arg1: memref<128x3xi32, #tpu.memory_space<vmem>>, %arg2: memref<32x32xbf16, #tpu.memory_space<vmem>>, %arg3: memref<128x32xbf16, #tpu.memory_space<vmem>>, %arg4: memref<32x32xbf16, #tpu.memory_space<vmem>>, %arg5: memref<32x32xbf16, #tpu.memory_space<vmem>>, %arg6: memref<1x32xf32, #tpu.memory_space<vmem>>, %arg7: memref<1x32xf32, #tpu.memory_space<vmem>>, %arg8: memref<32x128xbf16, #tpu.memory_space<vmem>>, %arg9: memref<32x128xbf16, #tpu.memory_space<vmem>>, %arg10: memref<1x128xf32, #tpu.memory_space<vmem>>, %arg11: memref<32x128xbf16, #tpu.memory_space<vmem>>, %arg12: memref<1x128xf32, #tpu.memory_space<vmem>>, %arg13: memref<128x128xbf16, #tpu.memory_space<vmem>>, %arg14: memref<1x128xf32, #tpu.memory_space<vmem>>, %arg15: memref<256x128xf32, #tpu.memory_space<vmem>>, %arg16: memref<128x128xf32, #tpu.memory_space<vmem>>) attributes {dimension_semantics = [#tpu.dimension_semantics<parallel>], iteration_bounds = array<i64: 3>, scalar_prefetch = 0 : i64, scratch_operands = 0 : i64, tpu.core_type = #tpu.core_type<tc>, window_params = [{transform_indices = @transform_0, window_bounds = array<i64: 128, 3>}, {pipeline_mode = #tpu.pipeline_mode<synchronous>, transform_indices = @transform_1, window_bounds = array<i64: 32, 32>}, {transform_indices = @transform_2, window_bounds = array<i64: 128, 32>}, {pipeline_mode = #tpu.pipeline_mode<synchronous>, transform_indices = @transform_3, window_bounds = array<i64: 32, 32>}, {pipeline_mode = #tpu.pipeline_mode<synchronous>, transform_indices = @transform_4, window_bounds = array<i64: 32, 32>}, {pipeline_mode = #tpu.pipeline_mode<synchronous>, transform_indices = @transform_5, window_bounds = array<i64: 1, 32>}, {pipeline_mode = #tpu.pipeline_mode<synchronous>, transform_indices = @transform_6, window_bounds = array<i64: 1, 32>}, {pipeline_mode = #tpu.pipeline_mode<synchronous>, transform_indices = @transform_7, window_bounds = array<i64: 32, 128>}, {pipeline_mode = #tpu.pipeline_mode<synchronous>, transform_indices = @transform_8, window_bounds = array<i64: 32, 128>}, {pipeline_mode = #tpu.pipeline_mode<synchronous>, transform_indices = @transform_9, window_bounds = array<i64: 1, 128>}, {pipeline_mode = #tpu.pipeline_mode<synchronous>, transform_indices = @transform_10, window_bounds = array<i64: 32, 128>}, {pipeline_mode = #tpu.pipeline_mode<synchronous>, transform_indices = @transform_11, window_bounds = array<i64: 1, 128>}, {pipeline_mode = #tpu.pipeline_mode<synchronous>, transform_indices = @transform_12, window_bounds = array<i64: 128, 128>}, {pipeline_mode = #tpu.pipeline_mode<synchronous>, transform_indices = @transform_13, window_bounds = array<i64: 1, 128>}, {pipeline_mode = #tpu.pipeline_mode<synchronous>, transform_indices = @transform_14, window_bounds = array<i64: 256, 128>}, {transform_indices = @transform_15, window_bounds = array<i64: 128, 128>}]} {
    %c0 = arith.constant 0 : index
    %c0_0 = arith.constant 0 : index
    %0 = vector.load %arg2[%c0, %c0_0] : memref<32x32xbf16, #tpu.memory_space<vmem>>, vector<32x32xbf16>
    %c0_1 = arith.constant 0 : index
    %c0_2 = arith.constant 0 : index
    %1 = vector.load %arg4[%c0_1, %c0_2] : memref<32x32xbf16, #tpu.memory_space<vmem>>, vector<32x32xbf16>
    %cst = arith.constant dense<0.000000e+00> : vector<32x32xf32>
    %2 = tpu.matmul %0, %1, %cst {dimension_numbers = #tpu.dot_dimension_numbers<[1], [0], [0], [1], [0, 0, 1, 1], [], []>} : vector<32x32xbf16>, vector<32x32xbf16>, vector<32x32xf32> -> vector<32x32xf32>
    %c0_3 = arith.constant 0 : index
    %c0_4 = arith.constant 0 : index
    %3 = vector.load %arg6[%c0_3, %c0_4] : memref<1x32xf32, #tpu.memory_space<vmem>>, vector<1x32xf32>
    %4 = vector.broadcast %3 : vector<1x32xf32> to vector<32x32xf32>
    %5 = arith.addf %2, %4 : vector<32x32xf32>
    %cst_5 = arith.constant 0.000000e+00 : f32
    %6 = vector.broadcast %cst_5 : f32 to vector<32x32xf32>
    %7 = arith.maximumf %5, %6 : vector<32x32xf32>
    %8 = arith.truncf %7 : vector<32x32xf32> to vector<32x32xbf16>
    %c0_6 = arith.constant 0 : index
    %c0_7 = arith.constant 0 : index
    %9 = vector.load %arg5[%c0_6, %c0_7] : memref<32x32xbf16, #tpu.memory_space<vmem>>, vector<32x32xbf16>
    %cst_8 = arith.constant dense<0.000000e+00> : vector<32x32xf32>
    %10 = tpu.matmul %0, %9, %cst_8 {dimension_numbers = #tpu.dot_dimension_numbers<[1], [0], [0], [1], [0, 0, 1, 1], [], []>} : vector<32x32xbf16>, vector<32x32xbf16>, vector<32x32xf32> -> vector<32x32xf32>
    %c0_9 = arith.constant 0 : index
    %c0_10 = arith.constant 0 : index
    %11 = vector.load %arg7[%c0_9, %c0_10] : memref<1x32xf32, #tpu.memory_space<vmem>>, vector<1x32xf32>
    %12 = vector.broadcast %11 : vector<1x32xf32> to vector<32x32xf32>
    %13 = arith.addf %10, %12 : vector<32x32xf32>
    %cst_11 = arith.constant 0.000000e+00 : f32
    %14 = vector.broadcast %cst_11 : f32 to vector<32x32xf32>
    %15 = arith.maximumf %13, %14 : vector<32x32xf32>
    %16 = arith.truncf %15 : vector<32x32xf32> to vector<32x32xbf16>
    %c0_12 = arith.constant 0 : index
    %c0_13 = arith.constant 0 : index
    %17 = vector.load %arg1[%c0_12, %c0_13] : memref<128x3xi32, #tpu.memory_space<vmem>>, vector<128x3xi32>
    %18 = vector.extract_strided_slice %17 {offsets = [0, 0], sizes = [128, 1], strides = [1, 1]} : vector<128x3xi32> to vector<128x1xi32>
    %19 = vector.extract_strided_slice %17 {offsets = [0, 1], sizes = [128, 1], strides = [1, 1]} : vector<128x3xi32> to vector<128x1xi32>
    %20 = vector.extract_strided_slice %17 {offsets = [0, 2], sizes = [128, 1], strides = [1, 1]} : vector<128x3xi32> to vector<128x1xi32>
    %21 = tpu.iota {dimensions = array<i32: 1>} : vector<128x32xi32>
    %22 = vector.broadcast %18 : vector<128x1xi32> to vector<128x32xi32>
    %23 = arith.cmpi eq, %21, %22 : vector<128x32xi32>
    %cst_14 = arith.constant 1.000000e+00 : f32
    %cst_15 = arith.constant 0.000000e+00 : f32
    %24 = vector.broadcast %cst_14 : f32 to vector<128x32xf32>
    %25 = vector.broadcast %cst_15 : f32 to vector<128x32xf32>
    %26 = arith.select %23, %24, %25 : vector<128x32xi1>, vector<128x32xf32>
    %27 = arith.truncf %26 : vector<128x32xf32> to vector<128x32xbf16>
    %28 = vector.broadcast %19 : vector<128x1xi32> to vector<128x32xi32>
    %29 = arith.cmpi eq, %21, %28 : vector<128x32xi32>
    %cst_16 = arith.constant 1.000000e+00 : f32
    %cst_17 = arith.constant 0.000000e+00 : f32
    %30 = vector.broadcast %cst_16 : f32 to vector<128x32xf32>
    %31 = vector.broadcast %cst_17 : f32 to vector<128x32xf32>
    %32 = arith.select %29, %30, %31 : vector<128x32xi1>, vector<128x32xf32>
    %33 = arith.truncf %32 : vector<128x32xf32> to vector<128x32xbf16>
    %cst_18 = arith.constant dense<0.000000e+00> : vector<128x32xf32>
    %34 = tpu.matmul %27, %8, %cst_18 {dimension_numbers = #tpu.dot_dimension_numbers<[1], [0], [0], [1], [0, 0, 1, 1], [], []>} : vector<128x32xbf16>, vector<32x32xbf16>, vector<128x32xf32> -> vector<128x32xf32>
    %35 = arith.truncf %34 : vector<128x32xf32> to vector<128x32xbf16>
    %cst_19 = arith.constant dense<0.000000e+00> : vector<128x32xf32>
    %36 = tpu.matmul %33, %16, %cst_19 {dimension_numbers = #tpu.dot_dimension_numbers<[1], [0], [0], [1], [0, 0, 1, 1], [], []>} : vector<128x32xbf16>, vector<32x32xbf16>, vector<128x32xf32> -> vector<128x32xf32>
    %37 = arith.truncf %36 : vector<128x32xf32> to vector<128x32xbf16>
    %c0_20 = arith.constant 0 : index
    %c0_21 = arith.constant 0 : index
    %38 = vector.load %arg8[%c0_20, %c0_21] : memref<32x128xbf16, #tpu.memory_space<vmem>>, vector<32x128xbf16>
    %cst_22 = arith.constant dense<0.000000e+00> : vector<128x128xf32>
    %39 = tpu.matmul %35, %38, %cst_22 {dimension_numbers = #tpu.dot_dimension_numbers<[1], [0], [0], [1], [0, 0, 1, 1], [], []>} : vector<128x32xbf16>, vector<32x128xbf16>, vector<128x128xf32> -> vector<128x128xf32>
    %c0_23 = arith.constant 0 : index
    %c0_24 = arith.constant 0 : index
    %40 = vector.load %arg9[%c0_23, %c0_24] : memref<32x128xbf16, #tpu.memory_space<vmem>>, vector<32x128xbf16>
    %cst_25 = arith.constant dense<0.000000e+00> : vector<128x128xf32>
    %41 = tpu.matmul %37, %40, %cst_25 {dimension_numbers = #tpu.dot_dimension_numbers<[1], [0], [0], [1], [0, 0, 1, 1], [], []>} : vector<128x32xbf16>, vector<32x128xbf16>, vector<128x128xf32> -> vector<128x128xf32>
    %42 = arith.addf %39, %41 : vector<128x128xf32>
    %c0_26 = arith.constant 0 : index
    %c0_27 = arith.constant 0 : index
    %43 = vector.load %arg10[%c0_26, %c0_27] : memref<1x128xf32, #tpu.memory_space<vmem>>, vector<1x128xf32>
    %44 = vector.broadcast %43 : vector<1x128xf32> to vector<128x128xf32>
    %45 = arith.addf %42, %44 : vector<128x128xf32>
    %c0_28 = arith.constant 0 : index
    %c0_29 = arith.constant 0 : index
    %46 = vector.load %arg3[%c0_28, %c0_29] : memref<128x32xbf16, #tpu.memory_space<vmem>>, vector<128x32xbf16>
    %c0_30 = arith.constant 0 : index
    %c0_31 = arith.constant 0 : index
    %47 = vector.load %arg11[%c0_30, %c0_31] : memref<32x128xbf16, #tpu.memory_space<vmem>>, vector<32x128xbf16>
    %cst_32 = arith.constant dense<0.000000e+00> : vector<128x128xf32>
    %48 = tpu.matmul %46, %47, %cst_32 {dimension_numbers = #tpu.dot_dimension_numbers<[1], [0], [0], [1], [0, 0, 1, 1], [], []>} : vector<128x32xbf16>, vector<32x128xbf16>, vector<128x128xf32> -> vector<128x128xf32>
    %c0_33 = arith.constant 0 : index
    %c0_34 = arith.constant 0 : index
    %49 = vector.load %arg12[%c0_33, %c0_34] : memref<1x128xf32, #tpu.memory_space<vmem>>, vector<1x128xf32>
    %50 = vector.broadcast %49 : vector<1x128xf32> to vector<128x128xf32>
    %51 = arith.addf %48, %50 : vector<128x128xf32>
    %52 = arith.mulf %45, %51 : vector<128x128xf32>
    %53 = arith.truncf %52 : vector<128x128xf32> to vector<128x128xbf16>
    %c0_35 = arith.constant 0 : index
    %c0_36 = arith.constant 0 : index
    %54 = vector.load %arg13[%c0_35, %c0_36] : memref<128x128xbf16, #tpu.memory_space<vmem>>, vector<128x128xbf16>
    %cst_37 = arith.constant dense<0.000000e+00> : vector<128x128xf32>
    %55 = tpu.matmul %53, %54, %cst_37 {dimension_numbers = #tpu.dot_dimension_numbers<[1], [0], [0], [1], [0, 0, 1, 1], [], []>} : vector<128x128xbf16>, vector<128x128xbf16>, vector<128x128xf32> -> vector<128x128xf32>
    %c0_38 = arith.constant 0 : index
    %c0_39 = arith.constant 0 : index
    %56 = vector.load %arg14[%c0_38, %c0_39] : memref<1x128xf32, #tpu.memory_space<vmem>>, vector<1x128xf32>
    %57 = vector.broadcast %56 : vector<1x128xf32> to vector<128x128xf32>
    %58 = arith.addf %55, %57 : vector<128x128xf32>
    %59 = tpu.iota {dimensions = array<i32: 1>} : vector<128x256xi32>
    %60 = vector.broadcast %20 : vector<128x1xi32> to vector<128x256xi32>
    %61 = arith.cmpi eq, %59, %60 : vector<128x256xi32>
    %cst_40 = arith.constant 1.000000e+00 : f32
    %cst_41 = arith.constant 0.000000e+00 : f32
    %62 = vector.broadcast %cst_40 : f32 to vector<128x256xf32>
    %63 = vector.broadcast %cst_41 : f32 to vector<128x256xf32>
    %64 = arith.select %61, %62, %63 : vector<128x256xi1>, vector<128x256xf32>
    %c0_42 = arith.constant 0 : index
    %c0_43 = arith.constant 0 : index
    %65 = vector.load %arg15[%c0_42, %c0_43] : memref<256x128xf32, #tpu.memory_space<vmem>>, vector<256x128xf32>
    %cst_44 = arith.constant dense<0.000000e+00> : vector<128x128xf32>
    %66 = tpu.matmul %64, %65, %cst_44 {dimension_numbers = #tpu.dot_dimension_numbers<[1], [0], [0], [1], [0, 0, 1, 1], [], []>} : vector<128x256xf32>, vector<256x128xf32>, vector<128x128xf32> -> vector<128x128xf32>
    %67 = arith.addf %58, %66 : vector<128x128xf32>
    %c0_45 = arith.constant 0 : index
    %c0_46 = arith.constant 0 : index
    %68 = vector.load %arg16[%c0_45, %c0_46] : memref<128x128xf32, #tpu.memory_space<vmem>>, vector<128x128xf32>
    tpu.vector_store %arg16[%c0_45, %c0_46], %67 {strides = array<i32>} : memref<128x128xf32, #tpu.memory_space<vmem>>, vector<128x128xf32>,
    return
  }
  func.func @transform_0(%arg0: i32) -> (i32, i32) {
    %c0_i32 = arith.constant 0 : i32
    %c0_i32_0 = arith.constant 0 : i32
    return %arg0, %c0_i32 : i32, i32
  }
  func.func @transform_1(%arg0: i32) -> (i32, i32) {
    %c0_i32 = arith.constant 0 : i32
    %c0_i32_0 = arith.constant 0 : i32
    %c0_i32_1 = arith.constant 0 : i32
    return %c0_i32, %c0_i32_0 : i32, i32
  }
  func.func @transform_2(%arg0: i32) -> (i32, i32) {
    %c0_i32 = arith.constant 0 : i32
    %c0_i32_0 = arith.constant 0 : i32
    return %arg0, %c0_i32 : i32, i32
  }
  func.func @transform_3(%arg0: i32) -> (i32, i32) {
    %c0_i32 = arith.constant 0 : i32
    %c0_i32_0 = arith.constant 0 : i32
    %c0_i32_1 = arith.constant 0 : i32
    return %c0_i32, %c0_i32_0 : i32, i32
  }
  func.func @transform_4(%arg0: i32) -> (i32, i32) {
    %c0_i32 = arith.constant 0 : i32
    %c0_i32_0 = arith.constant 0 : i32
    %c0_i32_1 = arith.constant 0 : i32
    return %c0_i32, %c0_i32_0 : i32, i32
  }
  func.func @transform_5(%arg0: i32) -> (i32, i32) {
    %c0_i32 = arith.constant 0 : i32
    %c0_i32_0 = arith.constant 0 : i32
    %c0_i32_1 = arith.constant 0 : i32
    return %c0_i32, %c0_i32_0 : i32, i32
  }
  func.func @transform_6(%arg0: i32) -> (i32, i32) {
    %c0_i32 = arith.constant 0 : i32
    %c0_i32_0 = arith.constant 0 : i32
    %c0_i32_1 = arith.constant 0 : i32
    return %c0_i32, %c0_i32_0 : i32, i32
  }
  func.func @transform_7(%arg0: i32) -> (i32, i32) {
    %c0_i32 = arith.constant 0 : i32
    %c0_i32_0 = arith.constant 0 : i32
    %c0_i32_1 = arith.constant 0 : i32
    return %c0_i32, %c0_i32_0 : i32, i32
  }
  func.func @transform_8(%arg0: i32) -> (i32, i32) {
    %c0_i32 = arith.constant 0 : i32
    %c0_i32_0 = arith.constant 0 : i32
    %c0_i32_1 = arith.constant 0 : i32
    return %c0_i32, %c0_i32_0 : i32, i32
  }
  func.func @transform_9(%arg0: i32) -> (i32, i32) {
    %c0_i32 = arith.constant 0 : i32
    %c0_i32_0 = arith.constant 0 : i32
    %c0_i32_1 = arith.constant 0 : i32
    return %c0_i32, %c0_i32_0 : i32, i32
  }
  func.func @transform_10(%arg0: i32) -> (i32, i32) {
    %c0_i32 = arith.constant 0 : i32
    %c0_i32_0 = arith.constant 0 : i32
    %c0_i32_1 = arith.constant 0 : i32
    return %c0_i32, %c0_i32_0 : i32, i32
  }
  func.func @transform_11(%arg0: i32) -> (i32, i32) {
    %c0_i32 = arith.constant 0 : i32
    %c0_i32_0 = arith.constant 0 : i32
    %c0_i32_1 = arith.constant 0 : i32
    return %c0_i32, %c0_i32_0 : i32, i32
  }
  func.func @transform_12(%arg0: i32) -> (i32, i32) {
    %c0_i32 = arith.constant 0 : i32
    %c0_i32_0 = arith.constant 0 : i32
    %c0_i32_1 = arith.constant 0 : i32
    return %c0_i32, %c0_i32_0 : i32, i32
  }
  func.func @transform_13(%arg0: i32) -> (i32, i32) {
    %c0_i32 = arith.constant 0 : i32
    %c0_i32_0 = arith.constant 0 : i32
    %c0_i32_1 = arith.constant 0 : i32
    return %c0_i32, %c0_i32_0 : i32, i32
  }
  func.func @transform_14(%arg0: i32) -> (i32, i32) {
    %c0_i32 = arith.constant 0 : i32
    %c0_i32_0 = arith.constant 0 : i32
    %c0_i32_1 = arith.constant 0 : i32
    return %c0_i32, %c0_i32_0 : i32, i32
  }
  func.func @transform_15(%arg0: i32) -> (i32, i32) {
    %c0_i32 = arith.constant 0 : i32
    %c0_i32_0 = arith.constant 0 : i32
    return %arg0, %c0_i32 : i32, i32
  }
}

</mosaic_0001>

<llo_original>
// kernel: tpu_custom_call.1
$region0: #{tpu_custom_call.1}
  #allocation0 [shape = 'u32[]', space=smem, size = 0x4, offset = 0x4, fixed_abs, tag = 'smem constant byte address 0x4 - core index']
  #allocation1 [shape = 'u32[72,128]{1,0:T(1,128)}', space=vmem, size = 0x9000, scoped, tag = 'internal scratch']
  %s0 = inlined_call_operand.vmem [shape: s32[384,3], index: 0, kind: input, shape index: {}]
  %s1 = inlined_call_operand.vmem [shape: bf16[32,32], index: 1, kind: input, shape index: {}]
  %s2 = inlined_call_operand.vmem [shape: bf16[384,32], index: 2, kind: input, shape index: {}]
  %s3 = inlined_call_operand.vmem [shape: bf16[32,32], index: 3, kind: input, shape index: {}]
  %s4 = inlined_call_operand.vmem [shape: bf16[32,32], index: 4, kind: input, shape index: {}]
  %s5 = inlined_call_operand.vmem [shape: f32[1,32], index: 5, kind: input, shape index: {}]
  %s6 = inlined_call_operand.vmem [shape: f32[1,32], index: 6, kind: input, shape index: {}]
  %s7 = inlined_call_operand.vmem [shape: bf16[32,128], index: 7, kind: input, shape index: {}]
  %s8 = inlined_call_operand.vmem [shape: bf16[32,128], index: 8, kind: input, shape index: {}]
  %s9 = inlined_call_operand.vmem [shape: f32[1,128], index: 9, kind: input, shape index: {}]
  %s10 = inlined_call_operand.vmem [shape: bf16[32,128], index: 10, kind: input, shape index: {}]
  %s11 = inlined_call_operand.vmem [shape: f32[1,128], index: 11, kind: input, shape index: {}]
  %s12 = inlined_call_operand.vmem [shape: bf16[128,128], index: 12, kind: input, shape index: {}]
  %s13 = inlined_call_operand.vmem [shape: f32[1,128], index: 13, kind: input, shape index: {}]
  %s14 = inlined_call_operand.vmem [shape: f32[256,128], index: 14, kind: input, shape index: {}]
  %s15 = inlined_call_operand.hbm [shape: f32[384,128], index: 15, kind: output, shape index: {}]
  %s16 = sld [smem:[#allocation0]]
  $region93: #{tpu_custom_call.1} parent=0
    _
  %s18 = ssub.s32 1, %s16
  %s19 = scalar_select 0, %s18, %s16
  $region1: #{tpu_custom_call.1} parent=0
    #allocation2 [shape = 'u8[131072]{0}', space=vmem, size = 0x20000, scoped, tag = 'output window, operand 0']
    #allocation3 [shape = 's32[2]{0}', space=sflag, size = 0x8, scoped, tag = 'scoped memory for tpu_custom_call.1']
    %20 = vsyncpa [#allocation3], 0
    %s21 = scalar_lea.sflag [#allocation3], 1
    %22 = vsyncpa %s21, 0
    loop: start=0, step=1, limit=5
    $region2: #{tpu_custom_call.1} parent=1 // loop_pre_header
      _
    $region3: #{tpu_custom_call.1} parent=1 // loop_header
      %s24 = sphi 0, %s28
      %p25 = scmp.ge.s32.totalorder %s24, 5
      %s34 = sphi 0, %s36
      %s37 = sphi 0, %s34
      %s38 = sphi 0, %s37
      %s54 = sphi 0, %s38
      %s58 = sphi 0, %s58
      %s60 = sphi 0, %s58
      %s61 = sphi 0, %s60
      %s75 = sphi 0, %s61
      %s81 = sphi 0, %s83
      %s84 = sphi 0, %s81
      %s85 = sphi 0, %s84
      %s101 = sphi 0, %s85
      %s105 = sphi 0, %s105
      %s107 = sphi 0, %s105
      %s108 = sphi 0, %s107
      %s122 = sphi 0, %s108
      %s126 = sphi 0, %s126
      %s128 = sphi 0, %s126
      %s129 = sphi 0, %s128
      %s143 = sphi 0, %s129
      %s147 = sphi 0, %s147
      %s149 = sphi 0, %s147
      %s150 = sphi 0, %s149
      %s164 = sphi 0, %s150
      %s168 = sphi 0, %s168
      %s170 = sphi 0, %s168
      %s171 = sphi 0, %s170
      %s185 = sphi 0, %s171
      %s189 = sphi 0, %s189
      %s191 = sphi 0, %s189
      %s192 = sphi 0, %s191
      %s206 = sphi 0, %s192
      %s210 = sphi 0, %s210
      %s212 = sphi 0, %s210
      %s213 = sphi 0, %s212
      %s227 = sphi 0, %s213
      %s231 = sphi 0, %s231
      %s233 = sphi 0, %s231
      %s234 = sphi 0, %s233
      %s248 = sphi 0, %s234
      %s252 = sphi 0, %s252
      %s254 = sphi 0, %s252
      %s255 = sphi 0, %s254
      %s269 = sphi 0, %s255
      %s273 = sphi 0, %s273
      %s275 = sphi 0, %s273
      %s276 = sphi 0, %s275
      %s290 = sphi 0, %s276
      %s294 = sphi 0, %s294
      %s296 = sphi 0, %s294
      %s297 = sphi 0, %s296
      %s311 = sphi 0, %s297
      %s315 = sphi 0, %s315
      %s317 = sphi 0, %s315
      %s318 = sphi 0, %s317
      %s332 = sphi 0, %s318
      %s336 = sphi 0, %s336
      %s338 = sphi 0, %s336
      %s339 = sphi 0, %s338
      %s353 = sphi 0, %s339
      %s359 = sphi 0, %s361
      %s362 = sphi 0, %s359
      %s363 = sphi 0, %s362
      %s379 = sphi 0, %s363
    $region4: #{tpu_custom_call.1} parent=1 // loop_header_branch
      %27 = sbr.rel (%p25) target = $region8
    $region5: #{tpu_custom_call.1} parent=1 // loop_body
      %s29 = ssub.s32 %s24, 1
      %s30 = ssub.s32 %s24, 2
      %s31 = sadd.s32 %s24, 1
      %s32 = ssub.s32 %s24, %s31
      %p33 = scmp.eq.s32.totalorder %s32, 0
      %s35 = sadd.s32 %s34, 1
      %s36 = scalar_select %p33, %s34, %s35
      %p39 = pneg %p33
      %p40 = scmp.eq.s32.totalorder %s24, 2
      %p41 = por %p39, %p40
      %p42 = scmp.ne.s32.totalorder %s34, %s37
      %p43 = scmp.eq.s32.totalorder %s24, 0
      %p44 = por %p42, %p43
      %p45 = scmp.ne.s32.totalorder %s34, %s37
      %p46 = scmp.eq.s32.totalorder %s29, 2
      %p47 = por %p45, %p46
      %p48 = scmp.ne.s32.totalorder %s37, %s38
      %p49 = scmp.eq.s32.totalorder %s29, 0
      %p50 = por %p48, %p49
      %p51 = scmp.ne.s32.totalorder %s37, %s38
      %p52 = scmp.eq.s32.totalorder %s30, 2
      %p53 = por %p51, %p52
      %p55 = scmp.ne.s32.totalorder %s38, %s54
      %p56 = scmp.eq.s32.totalorder %s30, 0
      %p57 = por %p55, %p56
      %s59 = sadd.s32 %s58, 1
      %p62 = scmp.eq.s32.totalorder %s24, 2
      %p63 = scmp.ne.s32.totalorder %s58, %s60
      %p64 = scmp.eq.s32.totalorder %s24, 0
      %p65 = por %p63, %p64
      %p66 = scmp.ne.s32.totalorder %s58, %s60
      %p67 = scmp.eq.s32.totalorder %s29, 2
      %p68 = por %p66, %p67
      %p69 = scmp.ne.s32.totalorder %s60, %s61
      %p70 = scmp.eq.s32.totalorder %s29, 0
      %p71 = por %p69, %p70
      %p72 = scmp.ne.s32.totalorder %s60, %s61
      %p73 = scmp.eq.s32.totalorder %s30, 2
      %p74 = por %p72, %p73
      %p76 = scmp.ne.s32.totalorder %s61, %s75
      %p77 = scmp.eq.s32.totalorder %s30, 0
      %p78 = por %p76, %p77
      %s79 = ssub.s32 %s24, %s31
      %p80 = scmp.eq.s32.totalorder %s79, 0
      %s82 = sadd.s32 %s81, 1
      %s83 = scalar_select %p80, %s81, %s82
      %p86 = pneg %p80
      %p87 = scmp.eq.s32.totalorder %s24, 2
      %p88 = por %p86, %p87
      %p89 = scmp.ne.s32.totalorder %s81, %s84
      %p90 = scmp.eq.s32.totalorder %s24, 0
      %p91 = por %p89, %p90
      %p92 = scmp.ne.s32.totalorder %s81, %s84
      %p93 = scmp.eq.s32.totalorder %s29, 2
      %p94 = por %p92, %p93
      %p95 = scmp.ne.s32.totalorder %s84, %s85
      %p96 = scmp.eq.s32.totalorder %s29, 0
      %p97 = por %p95, %p96
      %p98 = scmp.ne.s32.totalorder %s84, %s85
      %p99 = scmp.eq.s32.totalorder %s30, 2
      %p100 = por %p98, %p99
      %p102 = scmp.ne.s32.totalorder %s85, %s101
      %p103 = scmp.eq.s32.totalorder %s30, 0
      %p104 = por %p102, %p103
      %s106 = sadd.s32 %s105, 1
      %p109 = scmp.eq.s32.totalorder %s24, 2
      %p110 = scmp.ne.s32.totalorder %s105, %s107
      %p111 = scmp.eq.s32.totalorder %s24, 0
      %p112 = por %p110, %p111
      %p113 = scmp.ne.s32.totalorder %s105, %s107
      %p114 = scmp.eq.s32.totalorder %s29, 2
      %p115 = por %p113, %p114
      %p116 = scmp.ne.s32.totalorder %s107, %s108
      %p117 = scmp.eq.s32.totalorder %s29, 0
      %p118 = por %p116, %p117
      %p119 = scmp.ne.s32.totalorder %s107, %s108
      %p120 = scmp.eq.s32.totalorder %s30, 2
      %p121 = por %p119, %p120
      %p123 = scmp.ne.s32.totalorder %s108, %s122
      %p124 = scmp.eq.s32.totalorder %s30, 0
      %p125 = por %p123, %p124
      %s127 = sadd.s32 %s126, 1
      %p130 = scmp.eq.s32.totalorder %s24, 2
      %p131 = scmp.ne.s32.totalorder %s126, %s128
      %p132 = scmp.eq.s32.totalorder %s24, 0
      %p133 = por %p131, %p132
      %p134 = scmp.ne.s32.totalorder %s126, %s128
      %p135 = scmp.eq.s32.totalorder %s29, 2
      %p136 = por %p134, %p135
      %p137 = scmp.ne.s32.totalorder %s128, %s129
      %p138 = scmp.eq.s32.totalorder %s29, 0
      %p139 = por %p137, %p138
      %p140 = scmp.ne.s32.totalorder %s128, %s129
      %p141 = scmp.eq.s32.totalorder %s30, 2
      %p142 = por %p140, %p141
      %p144 = scmp.ne.s32.totalorder %s129, %s143
      %p145 = scmp.eq.s32.totalorder %s30, 0
      %p146 = por %p144, %p145
      %s148 = sadd.s32 %s147, 1
      %p151 = scmp.eq.s32.totalorder %s24, 2
      %p152 = scmp.ne.s32.totalorder %s147, %s149
      %p153 = scmp.eq.s32.totalorder %s24, 0
      %p154 = por %p152, %p153
      %p155 = scmp.ne.s32.totalorder %s147, %s149
      %p156 = scmp.eq.s32.totalorder %s29, 2
      %p157 = por %p155, %p156
      %p158 = scmp.ne.s32.totalorder %s149, %s150
      %p159 = scmp.eq.s32.totalorder %s29, 0
      %p160 = por %p158, %p159
      %p161 = scmp.ne.s32.totalorder %s149, %s150
      %p162 = scmp.eq.s32.totalorder %s30, 2
      %p163 = por %p161, %p162
      %p165 = scmp.ne.s32.totalorder %s150, %s164
      %p166 = scmp.eq.s32.totalorder %s30, 0
      %p167 = por %p165, %p166
      %s169 = sadd.s32 %s168, 1
      %p172 = scmp.eq.s32.totalorder %s24, 2
      %p173 = scmp.ne.s32.totalorder %s168, %s170
      %p174 = scmp.eq.s32.totalorder %s24, 0
      %p175 = por %p173, %p174
      %p176 = scmp.ne.s32.totalorder %s168, %s170
      %p177 = scmp.eq.s32.totalorder %s29, 2
      %p178 = por %p176, %p177
      %p179 = scmp.ne.s32.totalorder %s170, %s171
      %p180 = scmp.eq.s32.totalorder %s29, 0
      %p181 = por %p179, %p180
      %p182 = scmp.ne.s32.totalorder %s170, %s171
      %p183 = scmp.eq.s32.totalorder %s30, 2
      %p184 = por %p182, %p183
      %p186 = scmp.ne.s32.totalorder %s171, %s185
      %p187 = scmp.eq.s32.totalorder %s30, 0
      %p188 = por %p186, %p187
      %s190 = sadd.s32 %s189, 1
      %p193 = scmp.eq.s32.totalorder %s24, 2
      %p194 = scmp.ne.s32.totalorder %s189, %s191
      %p195 = scmp.eq.s32.totalorder %s24, 0
      %p196 = por %p194, %p195
      %p197 = scmp.ne.s32.totalorder %s189, %s191
      %p198 = scmp.eq.s32.totalorder %s29, 2
      %p199 = por %p197, %p198
      %p200 = scmp.ne.s32.totalorder %s191, %s192
      %p201 = scmp.eq.s32.totalorder %s29, 0
      %p202 = por %p200, %p201
      %p203 = scmp.ne.s32.totalorder %s191, %s192
      %p204 = scmp.eq.s32.totalorder %s30, 2
      %p205 = por %p203, %p204
      %p207 = scmp.ne.s32.totalorder %s192, %s206
      %p208 = scmp.eq.s32.totalorder %s30, 0
      %p209 = por %p207, %p208
      %s211 = sadd.s32 %s210, 1
      %p214 = scmp.eq.s32.totalorder %s24, 2
      %p215 = scmp.ne.s32.totalorder %s210, %s212
      %p216 = scmp.eq.s32.totalorder %s24, 0
      %p217 = por %p215, %p216
      %p218 = scmp.ne.s32.totalorder %s210, %s212
      %p219 = scmp.eq.s32.totalorder %s29, 2
      %p220 = por %p218, %p219
      %p221 = scmp.ne.s32.totalorder %s212, %s213
      %p222 = scmp.eq.s32.totalorder %s29, 0
      %p223 = por %p221, %p222
      %p224 = scmp.ne.s32.totalorder %s212, %s213
      %p225 = scmp.eq.s32.totalorder %s30, 2
      %p226 = por %p224, %p225
      %p228 = scmp.ne.s32.totalorder %s213, %s227
      %p229 = scmp.eq.s32.totalorder %s30, 0
      %p230 = por %p228, %p229
      %s232 = sadd.s32 %s231, 1
      %p235 = scmp.eq.s32.totalorder %s24, 2
      %p236 = scmp.ne.s32.totalorder %s231, %s233
      %p237 = scmp.eq.s32.totalorder %s24, 0
      %p238 = por %p236, %p237
      %p239 = scmp.ne.s32.totalorder %s231, %s233
      %p240 = scmp.eq.s32.totalorder %s29, 2
      %p241 = por %p239, %p240
      %p242 = scmp.ne.s32.totalorder %s233, %s234
      %p243 = scmp.eq.s32.totalorder %s29, 0
      %p244 = por %p242, %p243
      %p245 = scmp.ne.s32.totalorder %s233, %s234
      %p246 = scmp.eq.s32.totalorder %s30, 2
      %p247 = por %p245, %p246
      %p249 = scmp.ne.s32.totalorder %s234, %s248
      %p250 = scmp.eq.s32.totalorder %s30, 0
      %p251 = por %p249, %p250
      %s253 = sadd.s32 %s252, 1
      %p256 = scmp.eq.s32.totalorder %s24, 2
      %p257 = scmp.ne.s32.totalorder %s252, %s254
      %p258 = scmp.eq.s32.totalorder %s24, 0
      %p259 = por %p257, %p258
      %p260 = scmp.ne.s32.totalorder %s252, %s254
      %p261 = scmp.eq.s32.totalorder %s29, 2
      %p262 = por %p260, %p261
      %p263 = scmp.ne.s32.totalorder %s254, %s255
      %p264 = scmp.eq.s32.totalorder %s29, 0
      %p265 = por %p263, %p264
      %p266 = scmp.ne.s32.totalorder %s254, %s255
      %p267 = scmp.eq.s32.totalorder %s30, 2
      %p268 = por %p266, %p267
      %p270 = scmp.ne.s32.totalorder %s255, %s269
      %p271 = scmp.eq.s32.totalorder %s30, 0
      %p272 = por %p270, %p271
      %s274 = sadd.s32 %s273, 1
      %p277 = scmp.eq.s32.totalorder %s24, 2
      %p278 = scmp.ne.s32.totalorder %s273, %s275
      %p279 = scmp.eq.s32.totalorder %s24, 0
      %p280 = por %p278, %p279
      %p281 = scmp.ne.s32.totalorder %s273, %s275
      %p282 = scmp.eq.s32.totalorder %s29, 2
      %p283 = por %p281, %p282
      %p284 = scmp.ne.s32.totalorder %s275, %s276
      %p285 = scmp.eq.s32.totalorder %s29, 0
      %p286 = por %p284, %p285
      %p287 = scmp.ne.s32.totalorder %s275, %s276
      %p288 = scmp.eq.s32.totalorder %s30, 2
      %p289 = por %p287, %p288
      %p291 = scmp.ne.s32.totalorder %s276, %s290
      %p292 = scmp.eq.s32.totalorder %s30, 0
      %p293 = por %p291, %p292
      %s295 = sadd.s32 %s294, 1
      %p298 = scmp.eq.s32.totalorder %s24, 2
      %p299 = scmp.ne.s32.totalorder %s294, %s296
      %p300 = scmp.eq.s32.totalorder %s24, 0
      %p301 = por %p299, %p300
      %p302 = scmp.ne.s32.totalorder %s294, %s296
      %p303 = scmp.eq.s32.totalorder %s29, 2
      %p304 = por %p302, %p303
      %p305 = scmp.ne.s32.totalorder %s296, %s297
      %p306 = scmp.eq.s32.totalorder %s29, 0
      %p307 = por %p305, %p306
      %p308 = scmp.ne.s32.totalorder %s296, %s297
      %p309 = scmp.eq.s32.totalorder %s30, 2
      %p310 = por %p308, %p309
      %p312 = scmp.ne.s32.totalorder %s297, %s311
      %p313 = scmp.eq.s32.totalorder %s30, 0
      %p314 = por %p312, %p313
      %s316 = sadd.s32 %s315, 1
      %p319 = scmp.eq.s32.totalorder %s24, 2
      %p320 = scmp.ne.s32.totalorder %s315, %s317
      %p321 = scmp.eq.s32.totalorder %s24, 0
      %p322 = por %p320, %p321
      %p323 = scmp.ne.s32.totalorder %s315, %s317
      %p324 = scmp.eq.s32.totalorder %s29, 2
      %p325 = por %p323, %p324
      %p326 = scmp.ne.s32.totalorder %s317, %s318
      %p327 = scmp.eq.s32.totalorder %s29, 0
      %p328 = por %p326, %p327
      %p329 = scmp.ne.s32.totalorder %s317, %s318
      %p330 = scmp.eq.s32.totalorder %s30, 2
      %p331 = por %p329, %p330
      %p333 = scmp.ne.s32.totalorder %s318, %s332
      %p334 = scmp.eq.s32.totalorder %s30, 0
      %p335 = por %p333, %p334
      %s337 = sadd.s32 %s336, 1
      %p340 = scmp.eq.s32.totalorder %s24, 2
      %p341 = scmp.ne.s32.totalorder %s336, %s338
      %p342 = scmp.eq.s32.totalorder %s24, 0
      %p343 = por %p341, %p342
      %p344 = scmp.ne.s32.totalorder %s336, %s338
      %p345 = scmp.eq.s32.totalorder %s29, 2
      %p346 = por %p344, %p345
      %p347 = scmp.ne.s32.totalorder %s338, %s339
      %p348 = scmp.eq.s32.totalorder %s29, 0
      %p349 = por %p347, %p348
      %p350 = scmp.ne.s32.totalorder %s338, %s339
      %p351 = scmp.eq.s32.totalorder %s30, 2
      %p352 = por %p350, %p351
      %p354 = scmp.ne.s32.totalorder %s339, %s353
      %p355 = scmp.eq.s32.totalorder %s30, 0
      %p356 = por %p354, %p355
      %s357 = ssub.s32 %s24, %s31
      %p358 = scmp.eq.s32.totalorder %s357, 0
      %s360 = sadd.s32 %s359, 1
      %s361 = scalar_select %p358, %s359, %s360
      %p364 = pneg %p358
      %p365 = scmp.eq.s32.totalorder %s24, 2
      %p366 = por %p364, %p365
      %p367 = scmp.ne.s32.totalorder %s359, %s362
      %p368 = scmp.eq.s32.totalorder %s24, 0
      %p369 = por %p367, %p368
      %p370 = scmp.ne.s32.totalorder %s359, %s362
      %p371 = scmp.eq.s32.totalorder %s29, 2
      %p372 = por %p370, %p371
      %p373 = scmp.ne.s32.totalorder %s362, %s363
      %p374 = scmp.eq.s32.totalorder %s29, 0
      %p375 = por %p373, %p374
      %p376 = scmp.ne.s32.totalorder %s362, %s363
      %p377 = scmp.eq.s32.totalorder %s30, 2
      %p378 = por %p376, %p377
      %p380 = scmp.ne.s32.totalorder %s363, %s379
      %p381 = scmp.eq.s32.totalorder %s30, 0
      %p382 = por %p380, %p381
      %p383 = scmp.le.s32.totalorder 1, %s24
      %p384 = scmp.lt.s32.totalorder %s24, 4
      %p385 = pnand %p383, %p384
      %p386 = pneg %p385
      // Predicated region
      $region9: #{tpu_custom_call.1} parent=5 // pred_check
        _
      $region10: #{tpu_custom_call.1} parent=5 // pred_check_branch
        %388 = sbr.rel (%p385) target = $region12
      $region11: #{tpu_custom_call.1} parent=5 // pred_region
        %s389 = ssub.s32 %s24, 1
        // Predicated region
        $region13: #{tpu_custom_call.1} parent=11 // pred_check
          %p390 = pneg %p71
        $region14: #{tpu_custom_call.1} parent=11 // pred_check_branch
          %392 = sbr.rel (%p390) target = $region16
        $region15: #{tpu_custom_call.1} parent=11 // pred_region
          _
        $region16: #{tpu_custom_call.1} parent=11 // pred_fallthru
          _
        // Predicated region
        $region17: #{tpu_custom_call.1} parent=11 // pred_check
          %p393 = pneg %p118
        $region18: #{tpu_custom_call.1} parent=11 // pred_check_branch
          %395 = sbr.rel (%p393) target = $region20
        $region19: #{tpu_custom_call.1} parent=11 // pred_region
          _
        $region20: #{tpu_custom_call.1} parent=11 // pred_fallthru
          _
        // Predicated region
        $region21: #{tpu_custom_call.1} parent=11 // pred_check
          %p396 = pneg %p139
        $region22: #{tpu_custom_call.1} parent=11 // pred_check_branch
          %398 = sbr.rel (%p396) target = $region24
        $region23: #{tpu_custom_call.1} parent=11 // pred_region
          _
        $region24: #{tpu_custom_call.1} parent=11 // pred_fallthru
          _
        // Predicated region
        $region25: #{tpu_custom_call.1} parent=11 // pred_check
          %p399 = pneg %p160
        $region26: #{tpu_custom_call.1} parent=11 // pred_check_branch
          %401 = sbr.rel (%p399) target = $region28
        $region27: #{tpu_custom_call.1} parent=11 // pred_region
          _
        $region28: #{tpu_custom_call.1} parent=11 // pred_fallthru
          _
        // Predicated region
        $region29: #{tpu_custom_call.1} parent=11 // pred_check
          %p402 = pneg %p181
        $region30: #{tpu_custom_call.1} parent=11 // pred_check_branch
          %404 = sbr.rel (%p402) target = $region32
        $region31: #{tpu_custom_call.1} parent=11 // pred_region
          _
        $region32: #{tpu_custom_call.1} parent=11 // pred_fallthru
          _
        // Predicated region
        $region33: #{tpu_custom_call.1} parent=11 // pred_check
          %p405 = pneg %p202
        $region34: #{tpu_custom_call.1} parent=11 // pred_check_branch
          %407 = sbr.rel (%p405) target = $region36
        $region35: #{tpu_custom_call.1} parent=11 // pred_region
          _
        $region36: #{tpu_custom_call.1} parent=11 // pred_fallthru
          _
        // Predicated region
        $region37: #{tpu_custom_call.1} parent=11 // pred_check
          %p408 = pneg %p223
        $region38: #{tpu_custom_call.1} parent=11 // pred_check_branch
          %410 = sbr.rel (%p408) target = $region40
        $region39: #{tpu_custom_call.1} parent=11 // pred_region
          _
        $region40: #{tpu_custom_call.1} parent=11 // pred_fallthru
          _
        // Predicated region
        $region41: #{tpu_custom_call.1} parent=11 // pred_check
          %p411 = pneg %p244
        $region42: #{tpu_custom_call.1} parent=11 // pred_check_branch
          %413 = sbr.rel (%p411) target = $region44
        $region43: #{tpu_custom_call.1} parent=11 // pred_region
          _
        $region44: #{tpu_custom_call.1} parent=11 // pred_fallthru
          _
        // Predicated region
        $region45: #{tpu_custom_call.1} parent=11 // pred_check
          %p414 = pneg %p265
        $region46: #{tpu_custom_call.1} parent=11 // pred_check_branch
          %416 = sbr.rel (%p414) target = $region48
        $region47: #{tpu_custom_call.1} parent=11 // pred_region
          _
        $region48: #{tpu_custom_call.1} parent=11 // pred_fallthru
          _
        // Predicated region
        $region49: #{tpu_custom_call.1} parent=11 // pred_check
          %p417 = pneg %p286
        $region50: #{tpu_custom_call.1} parent=11 // pred_check_branch
          %419 = sbr.rel (%p417) target = $region52
        $region51: #{tpu_custom_call.1} parent=11 // pred_region
          _
        $region52: #{tpu_custom_call.1} parent=11 // pred_fallthru
          _
        // Predicated region
        $region53: #{tpu_custom_call.1} parent=11 // pred_check
          %p420 = pneg %p307
        $region54: #{tpu_custom_call.1} parent=11 // pred_check_branch
          %422 = sbr.rel (%p420) target = $region56
        $region55: #{tpu_custom_call.1} parent=11 // pred_region
          _
        $region56: #{tpu_custom_call.1} parent=11 // pred_fallthru
          _
        // Predicated region
        $region57: #{tpu_custom_call.1} parent=11 // pred_check
          %p423 = pneg %p328
        $region58: #{tpu_custom_call.1} parent=11 // pred_check_branch
          %425 = sbr.rel (%p423) target = $region60
        $region59: #{tpu_custom_call.1} parent=11 // pred_region
          _
        $region60: #{tpu_custom_call.1} parent=11 // pred_fallthru
          _
        // Predicated region
        $region61: #{tpu_custom_call.1} parent=11 // pred_check
          %p426 = pneg %p349
        $region62: #{tpu_custom_call.1} parent=11 // pred_check_branch
          %428 = sbr.rel (%p426) target = $region64
        $region63: #{tpu_custom_call.1} parent=11 // pred_region
          _
        $region64: #{tpu_custom_call.1} parent=11 // pred_fallthru
          _
      $region12: #{tpu_custom_call.1} parent=5 // pred_fallthru
        _
      %p429 = scmp.lt.s32.totalorder %s24, 3
      // Predicated region
      $region65: #{tpu_custom_call.1} parent=5 // pred_check
        %p430 = pneg %p429
      $region66: #{tpu_custom_call.1} parent=5 // pred_check_branch
        %432 = sbr.rel (%p430) target = $region68
      $region67: #{tpu_custom_call.1} parent=5 // pred_region
        // Predicated region
        $region69: #{tpu_custom_call.1} parent=67 // pred_check
          %p433 = pneg %p44
        $region70: #{tpu_custom_call.1} parent=67 // pred_check_branch
          %435 = sbr.rel (%p433) target = $region72
        $region71: #{tpu_custom_call.1} parent=67 // pred_region
          %s436 = smul.u32 16, %s24
          %p437 = scmp.lt.s32.totalorder %s436, 47
          %s438 = scalar_select %p437, %s436, 47
          %s439 = smul.addr %s438, 8
          %s440 = scalar_lea.vmem %s0, %s439
          %s441 = smul.u32 16, %s24
        $region72: #{tpu_custom_call.1} parent=67 // pred_fallthru
          _
        // Predicated region
        $region73: #{tpu_custom_call.1} parent=67 // pred_check
          %p442 = pneg %p91
        $region74: #{tpu_custom_call.1} parent=67 // pred_check_branch
          %444 = sbr.rel (%p442) target = $region76
        $region75: #{tpu_custom_call.1} parent=67 // pred_region
          %s445 = smul.u32 16, %s24
          %p446 = scmp.lt.s32.totalorder %s445, 47
          %s447 = scalar_select %p446, %s445, 47
          %s448 = smul.addr %s447, 4
          %s449 = scalar_lea.vmem %s2, %s448
          %s450 = smul.u32 16, %s24
        $region76: #{tpu_custom_call.1} parent=67 // pred_fallthru
          _
      $region68: #{tpu_custom_call.1} parent=5 // pred_fallthru
        _
      %p451 = scmp.le.s32.totalorder 1, %s24
      %p452 = scmp.lt.s32.totalorder %s24, 4
      %p453 = pnand %p451, %p452
      %p454 = pneg %p453
      // Predicated region
      $region77: #{tpu_custom_call.1} parent=5 // pred_check
        _
      $region78: #{tpu_custom_call.1} parent=5 // pred_check_branch
        %456 = sbr.rel (%p453) target = $region80
      $region79: #{tpu_custom_call.1} parent=5 // pred_region
        %s457 = ssub.s32 %s24, 1
        %s458 = smul.u32 16, %s29
        %p459 = scmp.lt.s32.totalorder %s458, 47
        %s460 = scalar_select %p459, %s458, 47
        %s461 = smul.addr %s460, 8
        %s462 = scalar_lea.vmem %s0, %s461
        %p463 = pneg %p50
        %p464 = pneg %p47
        %p465 = pneg %p71
        %p466 = pneg %p68
        %s467 = smul.u32 16, %s29
        %p468 = scmp.lt.s32.totalorder %s467, 47
        %s469 = scalar_select %p468, %s467, 47
        %s470 = smul.addr %s469, 4
        %s471 = scalar_lea.vmem %s2, %s470
        %p472 = pneg %p97
        %p473 = pneg %p94
        %p474 = pneg %p118
        %p475 = pneg %p115
        %p476 = pneg %p139
        %p477 = pneg %p136
        %p478 = pneg %p160
        %p479 = pneg %p157
        %p480 = pneg %p181
        %p481 = pneg %p178
        %p482 = pneg %p202
        %p483 = pneg %p199
        %p484 = pneg %p223
        %p485 = pneg %p220
        %p486 = pneg %p244
        %p487 = pneg %p241
        %p488 = pneg %p265
        %p489 = pneg %p262
        %p490 = pneg %p286
        %p491 = pneg %p283
        %p492 = pneg %p307
        %p493 = pneg %p304
        %p494 = pneg %p328
        %p495 = pneg %p325
        %p496 = pneg %p349
        %p497 = pneg %p346
        %p498 = pneg %p375
        %p499 = pneg %p372
        %s500 = sand.u32 %s362, 1
        %s501 = scalar_lea.sflag [#allocation3], %s500
        %s502 = sand.u32 %s362, 1
        %s503 = smul.addr %s502, 128
        %s504 = scalar_lea.vmem [#allocation2], %s503
        %s505 = smul.u32 16, %s29
        %p506 = scmp.lt.s32.totalorder %s505, 47
        %s507 = scalar_select %p506, %s505, 47
        %s508 = smul.addr %s507, 8
        %s509 = scalar_lea.vmem %s0, %s508
        %s510 = smul.u32 16, %s29
        %s511 = smul.u32 16, %s29
        %p512 = scmp.lt.s32.totalorder %s511, 47
        %s513 = scalar_select %p512, %s511, 47
        %s514 = smul.addr %s513, 4
        %s515 = scalar_lea.vmem %s2, %s514
        %s516 = smul.u32 16, %s29
        %s517 = smul.u32 16, %s29
        %v519 = vld [vmem:[%s1] sm:$0xf]
        %v520 = vld [vmem:[%s1 + $0x4] sm:$0xf]
        %v521 = vld [vmem:[%s1 + $0x8] sm:$0xf]
        %v522 = vld [vmem:[%s1 + $0xc] sm:$0xf]
        %v523 = vld [vmem:[%s3] sm:$0xf]
        %v524 = vld [vmem:[%s3 + $0x4] sm:$0xf]
        %v525 = vld [vmem:[%s3 + $0x8] sm:$0xf]
        %v526 = vld [vmem:[%s3 + $0xc] sm:$0xf]
        %v527 = vld [vmem:[%s5] sm:$0x1]
        %v529 = vperm.slane %v527, 0
        %v535 = vunpack.c.l.b16 %v519
        %v536 = vunpack.c.l.b16 %v520
        %v537 = vunpack.c.l.b16 %v521
        %v538 = vunpack.c.l.b16 %v522
        %v539 = vpack.c.b16 %v536, %v535
        %v540 = vpack.c.b16 %v538, %v537
        %v545 = vunpack.c.l.b16 %v523
        %v546 = vunpack.c.l.b16 %v524
        %v547 = vunpack.c.l.b16 %v525
        %v548 = vunpack.c.l.b16 %v526
        %v549 = vpack.c.b16 %v546, %v545
        %v550 = vpack.c.b16 %v548, %v547
        %vm553 = vcmask 261120
        %v555 = vsel %vm553, %v539, 0
        %v558 = vsel %vm553, %v540, 0
        %560 = vmatpush.bf16.msra.mxu0 0
        %561 = vmatpush.bf16.msra.mxu0 0
        %562 = vmatpush.bf16.msra.mxu0 0
        %563 = vmatpush.bf16.msra.mxu0 0
        %564 = vmatpush.bf16.msra.mxu0 0
        %565 = vmatpush.bf16.msra.mxu0 0
        %566 = vmatpush.bf16.msra.mxu0 %v550
        %567 = vmatpush.bf16.msra.mxu0 %v549
        %568 = vmatmul.bf16.gmra.mxu0 %v555
        %v569 = vpop.f32.mrf.mxu0
        %v570 = vadd.f32 %v529, %v569
        %v571 = vpop.f32.mrf.mxu0
        %v572 = vadd.f32 %v529, %v571
        %573 = vmatmul.bf16.gmra.mxu0 %v558
        %v574 = vpop.f32.mrf.mxu0
        %v575 = vadd.f32 %v529, %v574
        %v576 = vpop.f32.mrf.mxu0
        %v577 = vadd.f32 %v529, %v576
        %578 = vdwg.mxu0
        %v579 = vmax.f32 %v570, 0.0
        %v580 = vmax.f32 %v572, 0.0
        %v581 = vmax.f32 %v575, 0.0
        %v582 = vmax.f32 %v577, 0.0
        %v583 = vpack.c.bf16 %v580, %v579
        %v584 = vpack.c.bf16 %v582, %v581
        %v585 = vld [vmem:[%s4] sm:$0xf]
        %v586 = vld [vmem:[%s4 + $0x4] sm:$0xf]
        %v587 = vld [vmem:[%s4 + $0x8] sm:$0xf]
        %v588 = vld [vmem:[%s4 + $0xc] sm:$0xf]
        %v589 = vld [vmem:[%s6] sm:$0x1]
        %v591 = vperm.slane %v589, 0
        %v597 = vunpack.c.l.b16 %v585
        %v598 = vunpack.c.l.b16 %v586
        %v599 = vunpack.c.l.b16 %v587
        %v600 = vunpack.c.l.b16 %v588
        %v601 = vpack.c.b16 %v598, %v597
        %v602 = vpack.c.b16 %v600, %v599
        %605 = vmatpush.bf16.msra.mxu0 0
        %606 = vmatpush.bf16.msra.mxu0 0
        %607 = vmatpush.bf16.msra.mxu0 0
        %608 = vmatpush.bf16.msra.mxu0 0
        %609 = vmatpush.bf16.msra.mxu0 0
        %610 = vmatpush.bf16.msra.mxu0 0
        %611 = vmatpush.bf16.msra.mxu0 %v602
        %612 = vmatpush.bf16.msra.mxu0 %v601
        %613 = vmatmul.bf16.gmra.mxu0 %v555
        %v614 = vpop.f32.mrf.mxu0
        %v615 = vadd.f32 %v591, %v614
        %v616 = vpop.f32.mrf.mxu0
        %v617 = vadd.f32 %v591, %v616
        %618 = vmatmul.bf16.gmra.mxu0 %v558
        %v619 = vpop.f32.mrf.mxu0
        %v620 = vadd.f32 %v591, %v619
        %v621 = vpop.f32.mrf.mxu0
        %v622 = vadd.f32 %v591, %v621
        %623 = vdwg.mxu0
        %v624 = vmax.f32 %v615, 0.0
        %v625 = vmax.f32 %v617, 0.0
        %v626 = vmax.f32 %v620, 0.0
        %v627 = vmax.f32 %v622, 0.0
        %v628 = vpack.c.bf16 %v625, %v624
        %v629 = vpack.c.bf16 %v627, %v626
        %v630 = vld [vmem:[%s509] sm:$0xff]
        %v631 = vld [vmem:[%s509 + $0x8] sm:$0xff]
        %v632 = vld [vmem:[%s509 + $0x10] sm:$0xff]
        %v633 = vld [vmem:[%s509 + $0x18] sm:$0xff]
        %v634 = vld [vmem:[%s509 + $0x20] sm:$0xff]
        %v635 = vld [vmem:[%s509 + $0x28] sm:$0xff]
        %v636 = vld [vmem:[%s509 + $0x30] sm:$0xff]
        %v637 = vld [vmem:[%s509 + $0x38] sm:$0xff]
        %v638 = vld [vmem:[%s509 + $0x40] sm:$0xff]
        %v639 = vld [vmem:[%s509 + $0x48] sm:$0xff]
        %v640 = vld [vmem:[%s509 + $0x50] sm:$0xff]
        %v641 = vld [vmem:[%s509 + $0x58] sm:$0xff]
        %v642 = vld [vmem:[%s509 + $0x60] sm:$0xff]
        %v643 = vld [vmem:[%s509 + $0x68] sm:$0xff]
        %v644 = vld [vmem:[%s509 + $0x70] sm:$0xff]
        %v645 = vld [vmem:[%s509 + $0x78] sm:$0xff]
        %v646 = vlaneseq
        %v647 = vand.u32 %v646, 127
        %648 = vset.pattern.permute.xlu0 0
        %649 = vperm.xlu0 %648, %v630
        %v650 = vpop.permute.xlu0 %649
        %651 = vset.pattern.permute.xlu0 0
        %652 = vperm.xlu0 %651, %v631
        %v653 = vpop.permute.xlu0 %652
        %654 = vset.pattern.permute.xlu0 0
        %655 = vperm.xlu0 %654, %v632
        %v656 = vpop.permute.xlu0 %655
        %657 = vset.pattern.permute.xlu0 0
        %658 = vperm.xlu0 %657, %v633
        %v659 = vpop.permute.xlu0 %658
        %660 = vset.pattern.permute.xlu0 0
        %661 = vperm.xlu0 %660, %v634
        %v662 = vpop.permute.xlu0 %661
        %663 = vset.pattern.permute.xlu0 0
        %664 = vperm.xlu0 %663, %v635
        %v665 = vpop.permute.xlu0 %664
        %666 = vset.pattern.permute.xlu0 0
        %667 = vperm.xlu0 %666, %v636
        %v668 = vpop.permute.xlu0 %667
        %669 = vset.pattern.permute.xlu0 0
        %670 = vperm.xlu0 %669, %v637
        %v671 = vpop.permute.xlu0 %670
        %672 = vset.pattern.permute.xlu0 0
        %673 = vperm.xlu0 %672, %v638
        %v674 = vpop.permute.xlu0 %673
        %675 = vset.pattern.permute.xlu0 0
        %676 = vperm.xlu0 %675, %v639
        %v677 = vpop.permute.xlu0 %676
        %678 = vset.pattern.permute.xlu0 0
        %679 = vperm.xlu0 %678, %v640
        %v680 = vpop.permute.xlu0 %679
        %681 = vset.pattern.permute.xlu0 0
        %682 = vperm.xlu0 %681, %v641
        %v683 = vpop.permute.xlu0 %682
        %684 = vset.pattern.permute.xlu0 0
        %685 = vperm.xlu0 %684, %v642
        %v686 = vpop.permute.xlu0 %685
        %687 = vset.pattern.permute.xlu0 0
        %688 = vperm.xlu0 %687, %v643
        %v689 = vpop.permute.xlu0 %688
        %690 = vset.pattern.permute.xlu0 0
        %691 = vperm.xlu0 %690, %v644
        %v692 = vpop.permute.xlu0 %691
        %693 = vset.pattern.permute.xlu0 0
        %694 = vperm.xlu0 %693, %v645
        %v695 = vpop.permute.xlu0 %694
        %vm696 = vcmp.eq.s32.totalorder %v647, %v650
        %vm697 = vcmp.eq.s32.totalorder %v647, %v653
        %vm698 = vcmp.eq.s32.totalorder %v647, %v656
        %vm699 = vcmp.eq.s32.totalorder %v647, %v659
        %vm700 = vcmp.eq.s32.totalorder %v647, %v662
        %vm701 = vcmp.eq.s32.totalorder %v647, %v665
        %vm702 = vcmp.eq.s32.totalorder %v647, %v668
        %vm703 = vcmp.eq.s32.totalorder %v647, %v671
        %vm704 = vcmp.eq.s32.totalorder %v647, %v674
        %vm705 = vcmp.eq.s32.totalorder %v647, %v677
        %vm706 = vcmp.eq.s32.totalorder %v647, %v680
        %vm707 = vcmp.eq.s32.totalorder %v647, %v683
        %vm708 = vcmp.eq.s32.totalorder %v647, %v686
        %vm709 = vcmp.eq.s32.totalorder %v647, %v689
        %vm710 = vcmp.eq.s32.totalorder %v647, %v692
        %vm711 = vcmp.eq.s32.totalorder %v647, %v695
        %v712 = vsel %vm696, 1.0, 0.0
        %v713 = vsel %vm697, 1.0, 0.0
        %v714 = vsel %vm698, 1.0, 0.0
        %v715 = vsel %vm699, 1.0, 0.0
        %v716 = vsel %vm700, 1.0, 0.0
        %v717 = vsel %vm701, 1.0, 0.0
        %v718 = vsel %vm702, 1.0, 0.0
        %v719 = vsel %vm703, 1.0, 0.0
        %v720 = vsel %vm704, 1.0, 0.0
        %v721 = vsel %vm705, 1.0, 0.0
        %v722 = vsel %vm706, 1.0, 0.0
        %v723 = vsel %vm707, 1.0, 0.0
        %v724 = vsel %vm708, 1.0, 0.0
        %v725 = vsel %vm709, 1.0, 0.0
        %v726 = vsel %vm710, 1.0, 0.0
        %v727 = vsel %vm711, 1.0, 0.0
        %v728 = vpack.c.bf16 %v713, %v712
        %v729 = vpack.c.bf16 %v715, %v714
        %v730 = vpack.c.bf16 %v717, %v716
        %v731 = vpack.c.bf16 %v719, %v718
        %v732 = vpack.c.bf16 %v721, %v720
        %v733 = vpack.c.bf16 %v723, %v722
        %v734 = vpack.c.bf16 %v725, %v724
        %v735 = vpack.c.bf16 %v727, %v726
        %736 = vset.pattern.permute.xlu0 1
        %737 = vperm.xlu0 %736, %v630
        %v738 = vpop.permute.xlu0 %737
        %739 = vset.pattern.permute.xlu0 1
        %740 = vperm.xlu0 %739, %v631
        %v741 = vpop.permute.xlu0 %740
        %742 = vset.pattern.permute.xlu0 1
        %743 = vperm.xlu0 %742, %v632
        %v744 = vpop.permute.xlu0 %743
        %745 = vset.pattern.permute.xlu0 1
        %746 = vperm.xlu0 %745, %v633
        %v747 = vpop.permute.xlu0 %746
        %748 = vset.pattern.permute.xlu0 1
        %749 = vperm.xlu0 %748, %v634
        %v750 = vpop.permute.xlu0 %749
        %751 = vset.pattern.permute.xlu0 1
        %752 = vperm.xlu0 %751, %v635
        %v753 = vpop.permute.xlu0 %752
        %754 = vset.pattern.permute.xlu0 1
        %755 = vperm.xlu0 %754, %v636
        %v756 = vpop.permute.xlu0 %755
        %757 = vset.pattern.permute.xlu0 1
        %758 = vperm.xlu0 %757, %v637
        %v759 = vpop.permute.xlu0 %758
        %760 = vset.pattern.permute.xlu0 1
        %761 = vperm.xlu0 %760, %v638
        %v762 = vpop.permute.xlu0 %761
        %763 = vset.pattern.permute.xlu0 1
        %764 = vperm.xlu0 %763, %v639
        %v765 = vpop.permute.xlu0 %764
        %766 = vset.pattern.permute.xlu0 1
        %767 = vperm.xlu0 %766, %v640
        %v768 = vpop.permute.xlu0 %767
        %769 = vset.pattern.permute.xlu0 1
        %770 = vperm.xlu0 %769, %v641
        %v771 = vpop.permute.xlu0 %770
        %772 = vset.pattern.permute.xlu0 1
        %773 = vperm.xlu0 %772, %v642
        %v774 = vpop.permute.xlu0 %773
        %775 = vset.pattern.permute.xlu0 1
        %776 = vperm.xlu0 %775, %v643
        %v777 = vpop.permute.xlu0 %776
        %778 = vset.pattern.permute.xlu0 1
        %779 = vperm.xlu0 %778, %v644
        %v780 = vpop.permute.xlu0 %779
        %781 = vset.pattern.permute.xlu0 1
        %782 = vperm.xlu0 %781, %v645
        %v783 = vpop.permute.xlu0 %782
        %vm784 = vcmp.eq.s32.totalorder %v647, %v738
        %vm785 = vcmp.eq.s32.totalorder %v647, %v741
        %vm786 = vcmp.eq.s32.totalorder %v647, %v744
        %vm787 = vcmp.eq.s32.totalorder %v647, %v747
        %vm788 = vcmp.eq.s32.totalorder %v647, %v750
        %vm789 = vcmp.eq.s32.totalorder %v647, %v753
        %vm790 = vcmp.eq.s32.totalorder %v647, %v756
        %vm791 = vcmp.eq.s32.totalorder %v647, %v759
        %vm792 = vcmp.eq.s32.totalorder %v647, %v762
        %vm793 = vcmp.eq.s32.totalorder %v647, %v765
        %vm794 = vcmp.eq.s32.totalorder %v647, %v768
        %vm795 = vcmp.eq.s32.totalorder %v647, %v771
        %vm796 = vcmp.eq.s32.totalorder %v647, %v774
        %vm797 = vcmp.eq.s32.totalorder %v647, %v777
        %vm798 = vcmp.eq.s32.totalorder %v647, %v780
        %vm799 = vcmp.eq.s32.totalorder %v647, %v783
        %v800 = vsel %vm784, 1.0, 0.0
        %v801 = vsel %vm785, 1.0, 0.0
        %v802 = vsel %vm786, 1.0, 0.0
        %v803 = vsel %vm787, 1.0, 0.0
        %v804 = vsel %vm788, 1.0, 0.0
        %v805 = vsel %vm789, 1.0, 0.0
        %v806 = vsel %vm790, 1.0, 0.0
        %v807 = vsel %vm791, 1.0, 0.0
        %v808 = vsel %vm792, 1.0, 0.0
        %v809 = vsel %vm793, 1.0, 0.0
        %v810 = vsel %vm794, 1.0, 0.0
        %v811 = vsel %vm795, 1.0, 0.0
        %v812 = vsel %vm796, 1.0, 0.0
        %v813 = vsel %vm797, 1.0, 0.0
        %v814 = vsel %vm798, 1.0, 0.0
        %v815 = vsel %vm799, 1.0, 0.0
        %v816 = vpack.c.bf16 %v801, %v800
        %v817 = vpack.c.bf16 %v803, %v802
        %v818 = vpack.c.bf16 %v805, %v804
        %v819 = vpack.c.bf16 %v807, %v806
        %v820 = vpack.c.bf16 %v809, %v808
        %v821 = vpack.c.bf16 %v811, %v810
        %v822 = vpack.c.bf16 %v813, %v812
        %v823 = vpack.c.bf16 %v815, %v814
        %v825 = vsel %vm553, %v728, 0
        %v828 = vsel %vm553, %v729, 0
        %v831 = vsel %vm553, %v730, 0
        %v834 = vsel %vm553, %v731, 0
        %v837 = vsel %vm553, %v732, 0
        %v840 = vsel %vm553, %v733, 0
        %v843 = vsel %vm553, %v734, 0
        %v846 = vsel %vm553, %v735, 0
        %848 = vmatpush.bf16.msra.mxu0 0
        %849 = vmatpush.bf16.msra.mxu0 0
        %850 = vmatpush.bf16.msra.mxu0 0
        %851 = vmatpush.bf16.msra.mxu0 0
        %852 = vmatpush.bf16.msra.mxu0 0
        %853 = vmatpush.bf16.msra.mxu0 0
        %854 = vmatpush.bf16.msra.mxu0 %v584
        %855 = vmatpush.bf16.msra.mxu0 %v583
        %856 = vmatmul.bf16.gmra.mxu0 %v825
        %v857 = vpop.f32.mrf.mxu0
        %v858 = vadd.f32 0.0, %v857
        %v859 = vpop.f32.mrf.mxu0
        %v860 = vadd.f32 0.0, %v859
        %861 = vmatmul.bf16.gmra.mxu0 %v828
        %v862 = vpop.f32.mrf.mxu0
        %v863 = vadd.f32 0.0, %v862
        %v864 = vpop.f32.mrf.mxu0
        %v865 = vadd.f32 0.0, %v864
        %866 = vmatmul.bf16.gmra.mxu0 %v831
        %v867 = vpop.f32.mrf.mxu0
        %v868 = vadd.f32 0.0, %v867
        %v869 = vpop.f32.mrf.mxu0
        %v870 = vadd.f32 0.0, %v869
        %871 = vmatmul.bf16.gmra.mxu0 %v834
        %v872 = vpop.f32.mrf.mxu0
        %v873 = vadd.f32 0.0, %v872
        %v874 = vpop.f32.mrf.mxu0
        %v875 = vadd.f32 0.0, %v874
        %876 = vmatmul.bf16.gmra.mxu0 %v837
        %v877 = vpop.f32.mrf.mxu0
        %v878 = vadd.f32 0.0, %v877
        %v879 = vpop.f32.mrf.mxu0
        %v880 = vadd.f32 0.0, %v879
        %881 = vmatmul.bf16.gmra.mxu0 %v840
        %v882 = vpop.f32.mrf.mxu0
        %v883 = vadd.f32 0.0, %v882
        %v884 = vpop.f32.mrf.mxu0
        %v885 = vadd.f32 0.0, %v884
        %886 = vmatmul.bf16.gmra.mxu0 %v843
        %v887 = vpop.f32.mrf.mxu0
        %v888 = vadd.f32 0.0, %v887
        %v889 = vpop.f32.mrf.mxu0
        %v890 = vadd.f32 0.0, %v889
        %891 = vmatmul.bf16.gmra.mxu0 %v846
        %v892 = vpop.f32.mrf.mxu0
        %v893 = vadd.f32 0.0, %v892
        %v894 = vpop.f32.mrf.mxu0
        %v895 = vadd.f32 0.0, %v894
        %896 = vdwg.mxu0
        %v897 = vpack.c.bf16 %v860, %v858
        %v898 = vpack.c.bf16 %v865, %v863
        %v899 = vpack.c.bf16 %v870, %v868
        %v900 = vpack.c.bf16 %v875, %v873
        %v901 = vpack.c.bf16 %v880, %v878
        %v902 = vpack.c.bf16 %v885, %v883
        %v903 = vpack.c.bf16 %v890, %v888
        %v904 = vpack.c.bf16 %v895, %v893
        %v906 = vsel %vm553, %v816, 0
        %v909 = vsel %vm553, %v817, 0
        %v912 = vsel %vm553, %v818, 0
        %v915 = vsel %vm553, %v819, 0
        %v918 = vsel %vm553, %v820, 0
        %v921 = vsel %vm553, %v821, 0
        %v924 = vsel %vm553, %v822, 0
        %v927 = vsel %vm553, %v823, 0
        %929 = vmatpush.bf16.msra.mxu0 0
        %930 = vmatpush.bf16.msra.mxu0 0
        %931 = vmatpush.bf16.msra.mxu0 0
        %932 = vmatpush.bf16.msra.mxu0 0
        %933 = vmatpush.bf16.msra.mxu0 0
        %934 = vmatpush.bf16.msra.mxu0 0
        %935 = vmatpush.bf16.msra.mxu0 %v629
        %936 = vmatpush.bf16.msra.mxu0 %v628
        %937 = vmatmul.bf16.gmra.mxu0 %v906
        %v938 = vpop.f32.mrf.mxu0
        %v939 = vadd.f32 0.0, %v938
        %v940 = vpop.f32.mrf.mxu0
        %v941 = vadd.f32 0.0, %v940
        %942 = vmatmul.bf16.gmra.mxu0 %v909
        %v943 = vpop.f32.mrf.mxu0
        %v944 = vadd.f32 0.0, %v943
        %v945 = vpop.f32.mrf.mxu0
        %v946 = vadd.f32 0.0, %v945
        %947 = vmatmul.bf16.gmra.mxu0 %v912
        %v948 = vpop.f32.mrf.mxu0
        %v949 = vadd.f32 0.0, %v948
        %v950 = vpop.f32.mrf.mxu0
        %v951 = vadd.f32 0.0, %v950
        %952 = vmatmul.bf16.gmra.mxu0 %v915
        %v953 = vpop.f32.mrf.mxu0
        %v954 = vadd.f32 0.0, %v953
        %v955 = vpop.f32.mrf.mxu0
        %v956 = vadd.f32 0.0, %v955
        %957 = vmatmul.bf16.gmra.mxu0 %v918
        %v958 = vpop.f32.mrf.mxu0
        %v959 = vadd.f32 0.0, %v958
        %v960 = vpop.f32.mrf.mxu0
        %v961 = vadd.f32 0.0, %v960
        %962 = vmatmul.bf16.gmra.mxu0 %v921
        %v963 = vpop.f32.mrf.mxu0
        %v964 = vadd.f32 0.0, %v963
        %v965 = vpop.f32.mrf.mxu0
        %v966 = vadd.f32 0.0, %v965
        %967 = vmatmul.bf16.gmra.mxu0 %v924
        %v968 = vpop.f32.mrf.mxu0
        %v969 = vadd.f32 0.0, %v968
        %v970 = vpop.f32.mrf.mxu0
        %v971 = vadd.f32 0.0, %v970
        %972 = vmatmul.bf16.gmra.mxu0 %v927
        %v973 = vpop.f32.mrf.mxu0
        %v974 = vadd.f32 0.0, %v973
        %v975 = vpop.f32.mrf.mxu0
        %v976 = vadd.f32 0.0, %v975
        %977 = vdwg.mxu0
        %v978 = vpack.c.bf16 %v941, %v939
        %v979 = vpack.c.bf16 %v946, %v944
        %v980 = vpack.c.bf16 %v951, %v949
        %v981 = vpack.c.bf16 %v956, %v954
        %v982 = vpack.c.bf16 %v961, %v959
        %v983 = vpack.c.bf16 %v966, %v964
        %v984 = vpack.c.bf16 %v971, %v969
        %v985 = vpack.c.bf16 %v976, %v974
        %v986 = vld [vmem:[%s7] sm:$0xf]
        %v987 = vld [vmem:[%s7 + $0x4] sm:$0xf]
        %v988 = vld [vmem:[%s7 + $0x8] sm:$0xf]
        %v989 = vld [vmem:[%s7 + $0xc] sm:$0xf]
        %v990 = vld [vmem:[%s8] sm:$0xf]
        %v991 = vld [vmem:[%s8 + $0x4] sm:$0xf]
        %v992 = vld [vmem:[%s8 + $0x8] sm:$0xf]
        %v993 = vld [vmem:[%s8 + $0xc] sm:$0xf]
        %v998 = vunpack.c.l.b16 %v990
        %v999 = vunpack.c.l.b16 %v991
        %v1000 = vunpack.c.l.b16 %v992
        %v1001 = vunpack.c.l.b16 %v993
        %v1002 = vpack.c.b16 %v999, %v998
        %v1003 = vpack.c.b16 %v1001, %v1000
        %v1007 = vsel %vm553, %v978, 0
        %v1010 = vsel %vm553, %v979, 0
        %v1013 = vsel %vm553, %v980, 0
        %v1016 = vsel %vm553, %v981, 0
        %v1019 = vsel %vm553, %v982, 0
        %v1022 = vsel %vm553, %v983, 0
        %v1025 = vsel %vm553, %v984, 0
        %v1028 = vsel %vm553, %v985, 0
        %1030 = vmatpush.bf16.msra.mxu0 0
        %1031 = vmatpush.bf16.msra.mxu0 0
        %1032 = vmatpush.bf16.msra.mxu0 0
        %1033 = vmatpush.bf16.msra.mxu0 0
        %1034 = vmatpush.bf16.msra.mxu0 0
        %1035 = vmatpush.bf16.msra.mxu0 0
        %1036 = vmatpush.bf16.msra.mxu0 %v1003
        %1037 = vmatpush.bf16.msra.mxu0 %v1002
        %1038 = vmatmul.bf16.gmra.mxu0 %v1007
        %v1039 = vpop.f32.mrf.mxu0
        %v1040 = vadd.f32 0.0, %v1039
        %v1041 = vpop.f32.mrf.mxu0
        %v1042 = vadd.f32 0.0, %v1041
        %1043 = vmatmul.bf16.gmra.mxu0 %v1010
        %v1044 = vpop.f32.mrf.mxu0
        %v1045 = vadd.f32 0.0, %v1044
        %v1046 = vpop.f32.mrf.mxu0
        %v1047 = vadd.f32 0.0, %v1046
        %1048 = vmatmul.bf16.gmra.mxu0 %v1013
        %v1049 = vpop.f32.mrf.mxu0
        %v1050 = vadd.f32 0.0, %v1049
        %v1051 = vpop.f32.mrf.mxu0
        %v1052 = vadd.f32 0.0, %v1051
        %1053 = vmatmul.bf16.gmra.mxu0 %v1016
        %v1054 = vpop.f32.mrf.mxu0
        %v1055 = vadd.f32 0.0, %v1054
        %v1056 = vpop.f32.mrf.mxu0
        %v1057 = vadd.f32 0.0, %v1056
        %1058 = vmatmul.bf16.gmra.mxu0 %v1019
        %v1059 = vpop.f32.mrf.mxu0
        %v1060 = vadd.f32 0.0, %v1059
        %v1061 = vpop.f32.mrf.mxu0
        %v1062 = vadd.f32 0.0, %v1061
        %1063 = vmatmul.bf16.gmra.mxu0 %v1022
        %v1064 = vpop.f32.mrf.mxu0
        %v1065 = vadd.f32 0.0, %v1064
        %v1066 = vpop.f32.mrf.mxu0
        %v1067 = vadd.f32 0.0, %v1066
        %1068 = vmatmul.bf16.gmra.mxu0 %v1025
        %v1069 = vpop.f32.mrf.mxu0
        %v1070 = vadd.f32 0.0, %v1069
        %v1071 = vpop.f32.mrf.mxu0
        %v1072 = vadd.f32 0.0, %v1071
        %1073 = vmatmul.bf16.gmra.mxu0 %v1028
        %v1074 = vpop.f32.mrf.mxu0
        %v1075 = vadd.f32 0.0, %v1074
        %v1076 = vpop.f32.mrf.mxu0
        %v1077 = vadd.f32 0.0, %v1076
        %1078 = vdwg.mxu0
        %v1083 = vunpack.c.l.b16 %v986
        %v1084 = vunpack.c.l.b16 %v987
        %v1085 = vunpack.c.l.b16 %v988
        %v1086 = vunpack.c.l.b16 %v989
        %v1087 = vpack.c.b16 %v1084, %v1083
        %v1088 = vpack.c.b16 %v1086, %v1085
        %v1092 = vsel %vm553, %v897, 0
        %v1095 = vsel %vm553, %v898, 0
        %v1098 = vsel %vm553, %v899, 0
        %v1101 = vsel %vm553, %v900, 0
        %v1104 = vsel %vm553, %v901, 0
        %v1107 = vsel %vm553, %v902, 0
        %v1110 = vsel %vm553, %v903, 0
        %v1113 = vsel %vm553, %v904, 0
        %1115 = vmatpush.bf16.msra.mxu0 0
        %1116 = vmatpush.bf16.msra.mxu0 0
        %1117 = vmatpush.bf16.msra.mxu0 0
        %1118 = vmatpush.bf16.msra.mxu0 0
        %1119 = vmatpush.bf16.msra.mxu0 0
        %1120 = vmatpush.bf16.msra.mxu0 0
        %1121 = vmatpush.bf16.msra.mxu0 %v1088
        %1122 = vmatpush.bf16.msra.mxu0 %v1087
        %1123 = vmatmul.bf16.gmra.mxu0 %v1092
        %v1124 = vpop.f32.mrf.mxu0
        %v1125 = vadd.f32 %v1040, %v1124
        %v1126 = vpop.f32.mrf.mxu0
        %v1127 = vadd.f32 %v1042, %v1126
        %1128 = vmatmul.bf16.gmra.mxu0 %v1095
        %v1129 = vpop.f32.mrf.mxu0
        %v1130 = vadd.f32 %v1045, %v1129
        %v1131 = vpop.f32.mrf.mxu0
        %v1132 = vadd.f32 %v1047, %v1131
        %1133 = vmatmul.bf16.gmra.mxu0 %v1098
        %v1134 = vpop.f32.mrf.mxu0
        %v1135 = vadd.f32 %v1050, %v1134
        %v1136 = vpop.f32.mrf.mxu0
        %v1137 = vadd.f32 %v1052, %v1136
        %1138 = vmatmul.bf16.gmra.mxu0 %v1101
        %v1139 = vpop.f32.mrf.mxu0
        %v1140 = vadd.f32 %v1055, %v1139
        %v1141 = vpop.f32.mrf.mxu0
        %v1142 = vadd.f32 %v1057, %v1141
        %1143 = vmatmul.bf16.gmra.mxu0 %v1104
        %v1144 = vpop.f32.mrf.mxu0
        %v1145 = vadd.f32 %v1060, %v1144
        %v1146 = vpop.f32.mrf.mxu0
        %v1147 = vadd.f32 %v1062, %v1146
        %1148 = vmatmul.bf16.gmra.mxu0 %v1107
        %v1149 = vpop.f32.mrf.mxu0
        %v1150 = vadd.f32 %v1065, %v1149
        %v1151 = vpop.f32.mrf.mxu0
        %v1152 = vadd.f32 %v1067, %v1151
        %1153 = vmatmul.bf16.gmra.mxu0 %v1110
        %v1154 = vpop.f32.mrf.mxu0
        %v1155 = vadd.f32 %v1070, %v1154
        %v1156 = vpop.f32.mrf.mxu0
        %v1157 = vadd.f32 %v1072, %v1156
        %1158 = vmatmul.bf16.gmra.mxu0 %v1113
        %v1159 = vpop.f32.mrf.mxu0
        %v1160 = vadd.f32 %v1075, %v1159
        %v1161 = vpop.f32.mrf.mxu0
        %v1162 = vadd.f32 %v1077, %v1161
        %1163 = vdwg.mxu0
        %v1164 = vld [vmem:[%s9] sm:$0x1]
        %v1166 = vperm.slane %v1164, 0
        %v1168 = vadd.f32 %v1125, %v1166
        %v1169 = vadd.f32 %v1127, %v1166
        %v1170 = vadd.f32 %v1130, %v1166
        %v1171 = vadd.f32 %v1132, %v1166
        %v1172 = vadd.f32 %v1135, %v1166
        %v1173 = vadd.f32 %v1137, %v1166
        %v1174 = vadd.f32 %v1140, %v1166
        %v1175 = vadd.f32 %v1142, %v1166
        %v1176 = vadd.f32 %v1145, %v1166
        %v1177 = vadd.f32 %v1147, %v1166
        %v1178 = vadd.f32 %v1150, %v1166
        %v1179 = vadd.f32 %v1152, %v1166
        %v1180 = vadd.f32 %v1155, %v1166
        %v1181 = vadd.f32 %v1157, %v1166
        %v1182 = vadd.f32 %v1160, %v1166
        %v1183 = vadd.f32 %v1162, %v1166
        %v1184 = vld [vmem:[%s515] sm:$0xf]
        %v1185 = vld [vmem:[%s515 + $0x4] sm:$0xf]
        %v1186 = vld [vmem:[%s515 + $0x8] sm:$0xf]
        %v1187 = vld [vmem:[%s515 + $0xc] sm:$0xf]
        %v1188 = vld [vmem:[%s515 + $0x10] sm:$0xf]
        %v1189 = vld [vmem:[%s515 + $0x14] sm:$0xf]
        %v1190 = vld [vmem:[%s515 + $0x18] sm:$0xf]
        %v1191 = vld [vmem:[%s515 + $0x1c] sm:$0xf]
        %v1192 = vld [vmem:[%s515 + $0x20] sm:$0xf]
        %v1193 = vld [vmem:[%s515 + $0x24] sm:$0xf]
        %v1194 = vld [vmem:[%s515 + $0x28] sm:$0xf]
        %v1195 = vld [vmem:[%s515 + $0x2c] sm:$0xf]
        %v1196 = vld [vmem:[%s515 + $0x30] sm:$0xf]
        %v1197 = vld [vmem:[%s515 + $0x34] sm:$0xf]
        %v1198 = vld [vmem:[%s515 + $0x38] sm:$0xf]
        %v1199 = vld [vmem:[%s515 + $0x3c] sm:$0xf]
        %v1200 = vld [vmem:[%s10] sm:$0xf]
        %v1201 = vld [vmem:[%s10 + $0x4] sm:$0xf]
        %v1202 = vld [vmem:[%s10 + $0x8] sm:$0xf]
        %v1203 = vld [vmem:[%s10 + $0xc] sm:$0xf]
        %v1204 = vld [vmem:[%s11] sm:$0x1]
        %v1206 = vperm.slane %v1204, 0
        %v1224 = vunpack.c.l.b16 %v1184
        %v1225 = vunpack.c.l.b16 %v1185
        %v1226 = vunpack.c.l.b16 %v1186
        %v1227 = vunpack.c.l.b16 %v1187
        %v1228 = vunpack.c.l.b16 %v1188
        %v1229 = vunpack.c.l.b16 %v1189
        %v1230 = vunpack.c.l.b16 %v1190
        %v1231 = vunpack.c.l.b16 %v1191
        %v1232 = vunpack.c.l.b16 %v1192
        %v1233 = vunpack.c.l.b16 %v1193
        %v1234 = vunpack.c.l.b16 %v1194
        %v1235 = vunpack.c.l.b16 %v1195
        %v1236 = vunpack.c.l.b16 %v1196
        %v1237 = vunpack.c.l.b16 %v1197
        %v1238 = vunpack.c.l.b16 %v1198
        %v1239 = vunpack.c.l.b16 %v1199
        %v1240 = vpack.c.b16 %v1225, %v1224
        %v1241 = vpack.c.b16 %v1227, %v1226
        %v1242 = vpack.c.b16 %v1229, %v1228
        %v1243 = vpack.c.b16 %v1231, %v1230
        %v1244 = vpack.c.b16 %v1233, %v1232
        %v1245 = vpack.c.b16 %v1235, %v1234
        %v1246 = vpack.c.b16 %v1237, %v1236
        %v1247 = vpack.c.b16 %v1239, %v1238
        %v1252 = vunpack.c.l.b16 %v1200
        %v1253 = vunpack.c.l.b16 %v1201
        %v1254 = vunpack.c.l.b16 %v1202
        %v1255 = vunpack.c.l.b16 %v1203
        %v1256 = vpack.c.b16 %v1253, %v1252
        %v1257 = vpack.c.b16 %v1255, %v1254
        %v1261 = vsel %vm553, %v1240, 0
        %v1264 = vsel %vm553, %v1241, 0
        %v1267 = vsel %vm553, %v1242, 0
        %v1270 = vsel %vm553, %v1243, 0
        %v1273 = vsel %vm553, %v1244, 0
        %v1276 = vsel %vm553, %v1245, 0
        %v1279 = vsel %vm553, %v1246, 0
        %v1282 = vsel %vm553, %v1247, 0
        %1284 = vmatpush.bf16.msra.mxu0 0
        %1285 = vmatpush.bf16.msra.mxu0 0
        %1286 = vmatpush.bf16.msra.mxu0 0
        %1287 = vmatpush.bf16.msra.mxu0 0
        %1288 = vmatpush.bf16.msra.mxu0 0
        %1289 = vmatpush.bf16.msra.mxu0 0
        %1290 = vmatpush.bf16.msra.mxu0 %v1257
        %1291 = vmatpush.bf16.msra.mxu0 %v1256
        %1292 = vmatmul.bf16.gmra.mxu0 %v1261
        %v1293 = vpop.f32.mrf.mxu0
        %v1294 = vadd.f32 %v1206, %v1293
        %v1295 = vpop.f32.mrf.mxu0
        %v1296 = vadd.f32 %v1206, %v1295
        %1297 = vmatmul.bf16.gmra.mxu0 %v1264
        %v1298 = vpop.f32.mrf.mxu0
        %v1299 = vadd.f32 %v1206, %v1298
        %v1300 = vpop.f32.mrf.mxu0
        %v1301 = vadd.f32 %v1206, %v1300
        %1302 = vmatmul.bf16.gmra.mxu0 %v1267
        %v1303 = vpop.f32.mrf.mxu0
        %v1304 = vadd.f32 %v1206, %v1303
        %v1305 = vpop.f32.mrf.mxu0
        %v1306 = vadd.f32 %v1206, %v1305
        %1307 = vmatmul.bf16.gmra.mxu0 %v1270
        %v1308 = vpop.f32.mrf.mxu0
        %v1309 = vadd.f32 %v1206, %v1308
        %v1310 = vpop.f32.mrf.mxu0
        %v1311 = vadd.f32 %v1206, %v1310
        %1312 = vmatmul.bf16.gmra.mxu0 %v1273
        %v1313 = vpop.f32.mrf.mxu0
        %v1314 = vadd.f32 %v1206, %v1313
        %v1315 = vpop.f32.mrf.mxu0
        %v1316 = vadd.f32 %v1206, %v1315
        %1317 = vmatmul.bf16.gmra.mxu0 %v1276
        %v1318 = vpop.f32.mrf.mxu0
        %v1319 = vadd.f32 %v1206, %v1318
        %v1320 = vpop.f32.mrf.mxu0
        %v1321 = vadd.f32 %v1206, %v1320
        %1322 = vmatmul.bf16.gmra.mxu0 %v1279
        %v1323 = vpop.f32.mrf.mxu0
        %v1324 = vadd.f32 %v1206, %v1323
        %v1325 = vpop.f32.mrf.mxu0
        %v1326 = vadd.f32 %v1206, %v1325
        %1327 = vmatmul.bf16.gmra.mxu0 %v1282
        %v1328 = vpop.f32.mrf.mxu0
        %v1329 = vadd.f32 %v1206, %v1328
        %v1330 = vpop.f32.mrf.mxu0
        %v1331 = vadd.f32 %v1206, %v1330
        %1332 = vdwg.mxu0
        %v1333 = vmul.f32 %v1168, %v1294
        %v1334 = vmul.f32 %v1169, %v1296
        %v1335 = vmul.f32 %v1170, %v1299
        %v1336 = vmul.f32 %v1171, %v1301
        %v1337 = vmul.f32 %v1172, %v1304
        %v1338 = vmul.f32 %v1173, %v1306
        %v1339 = vmul.f32 %v1174, %v1309
        %v1340 = vmul.f32 %v1175, %v1311
        %v1341 = vmul.f32 %v1176, %v1314
        %v1342 = vmul.f32 %v1177, %v1316
        %v1343 = vmul.f32 %v1178, %v1319
        %v1344 = vmul.f32 %v1179, %v1321
        %v1345 = vmul.f32 %v1180, %v1324
        %v1346 = vmul.f32 %v1181, %v1326
        %v1347 = vmul.f32 %v1182, %v1329
        %v1348 = vmul.f32 %v1183, %v1331
        %v1349 = vpack.c.bf16 %v1334, %v1333
        %v1350 = vpack.c.bf16 %v1336, %v1335
        %v1351 = vpack.c.bf16 %v1338, %v1337
        %v1352 = vpack.c.bf16 %v1340, %v1339
        %v1353 = vpack.c.bf16 %v1342, %v1341
        %v1354 = vpack.c.bf16 %v1344, %v1343
        %v1355 = vpack.c.bf16 %v1346, %v1345
        %v1356 = vpack.c.bf16 %v1348, %v1347
        %v1357 = vld [vmem:[%s12] sm:$0xf]
        %v1358 = vld [vmem:[%s12 + $0x4] sm:$0xf]
        %v1359 = vld [vmem:[%s12 + $0x8] sm:$0xf]
        %v1360 = vld [vmem:[%s12 + $0xc] sm:$0xf]
        %v1361 = vld [vmem:[%s12 + $0x10] sm:$0xf]
        %v1362 = vld [vmem:[%s12 + $0x14] sm:$0xf]
        %v1363 = vld [vmem:[%s12 + $0x18] sm:$0xf]
        %v1364 = vld [vmem:[%s12 + $0x1c] sm:$0xf]
        %v1365 = vld [vmem:[%s12 + $0x20] sm:$0xf]
        %v1366 = vld [vmem:[%s12 + $0x24] sm:$0xf]
        %v1367 = vld [vmem:[%s12 + $0x28] sm:$0xf]
        %v1368 = vld [vmem:[%s12 + $0x2c] sm:$0xf]
        %v1369 = vld [vmem:[%s12 + $0x30] sm:$0xf]
        %v1370 = vld [vmem:[%s12 + $0x34] sm:$0xf]
        %v1371 = vld [vmem:[%s12 + $0x38] sm:$0xf]
        %v1372 = vld [vmem:[%s12 + $0x3c] sm:$0xf]
        %v1373 = vld [vmem:[%s13] sm:$0x1]
        %v1375 = vperm.slane %v1373, 0
        %v1393 = vunpack.c.l.b16 %v1357
        %v1394 = vunpack.c.l.b16 %v1358
        %v1395 = vunpack.c.l.b16 %v1359
        %v1396 = vunpack.c.l.b16 %v1360
        %v1397 = vunpack.c.l.b16 %v1361
        %v1398 = vunpack.c.l.b16 %v1362
        %v1399 = vunpack.c.l.b16 %v1363
        %v1400 = vunpack.c.l.b16 %v1364
        %v1401 = vunpack.c.l.b16 %v1365
        %v1402 = vunpack.c.l.b16 %v1366
        %v1403 = vunpack.c.l.b16 %v1367
        %v1404 = vunpack.c.l.b16 %v1368
        %v1405 = vunpack.c.l.b16 %v1369
        %v1406 = vunpack.c.l.b16 %v1370
        %v1407 = vunpack.c.l.b16 %v1371
        %v1408 = vunpack.c.l.b16 %v1372
        %v1409 = vpack.c.b16 %v1394, %v1393
        %v1410 = vpack.c.b16 %v1396, %v1395
        %v1411 = vpack.c.b16 %v1398, %v1397
        %v1412 = vpack.c.b16 %v1400, %v1399
        %v1413 = vpack.c.b16 %v1402, %v1401
        %v1414 = vpack.c.b16 %v1404, %v1403
        %v1415 = vpack.c.b16 %v1406, %v1405
        %v1416 = vpack.c.b16 %v1408, %v1407
        %1425 = vmatpush.bf16.msra.mxu0 %v1416
        %1426 = vmatpush.bf16.msra.mxu0 %v1415
        %1427 = vmatpush.bf16.msra.mxu0 %v1414
        %1428 = vmatpush.bf16.msra.mxu0 %v1413
        %1429 = vmatpush.bf16.msra.mxu0 %v1412
        %1430 = vmatpush.bf16.msra.mxu0 %v1411
        %1431 = vmatpush.bf16.msra.mxu0 %v1410
        %1432 = vmatpush.bf16.msra.mxu0 %v1409
        %1433 = vmatmul.bf16.gmra.mxu0 %v1349
        %v1434 = vpop.f32.mrf.mxu0
        %v1435 = vadd.f32 %v1375, %v1434
        %v1436 = vpop.f32.mrf.mxu0
        %v1437 = vadd.f32 %v1375, %v1436
        %1438 = vmatmul.bf16.gmra.mxu0 %v1350
        %v1439 = vpop.f32.mrf.mxu0
        %v1440 = vadd.f32 %v1375, %v1439
        %v1441 = vpop.f32.mrf.mxu0
        %v1442 = vadd.f32 %v1375, %v1441
        %1443 = vmatmul.bf16.gmra.mxu0 %v1351
        %v1444 = vpop.f32.mrf.mxu0
        %v1445 = vadd.f32 %v1375, %v1444
        %v1446 = vpop.f32.mrf.mxu0
        %v1447 = vadd.f32 %v1375, %v1446
        %1448 = vmatmul.bf16.gmra.mxu0 %v1352
        %v1449 = vpop.f32.mrf.mxu0
        %v1450 = vadd.f32 %v1375, %v1449
        %v1451 = vpop.f32.mrf.mxu0
        %v1452 = vadd.f32 %v1375, %v1451
        %1453 = vmatmul.bf16.gmra.mxu0 %v1353
        %v1454 = vpop.f32.mrf.mxu0
        %v1455 = vadd.f32 %v1375, %v1454
        %v1456 = vpop.f32.mrf.mxu0
        %v1457 = vadd.f32 %v1375, %v1456
        %1458 = vmatmul.bf16.gmra.mxu0 %v1354
        %v1459 = vpop.f32.mrf.mxu0
        %v1460 = vadd.f32 %v1375, %v1459
        %v1461 = vpop.f32.mrf.mxu0
        %v1462 = vadd.f32 %v1375, %v1461
        %1463 = vmatmul.bf16.gmra.mxu0 %v1355
        %v1464 = vpop.f32.mrf.mxu0
        %v1465 = vadd.f32 %v1375, %v1464
        %v1466 = vpop.f32.mrf.mxu0
        %v1467 = vadd.f32 %v1375, %v1466
        %1468 = vmatmul.bf16.gmra.mxu0 %v1356
        %v1469 = vpop.f32.mrf.mxu0
        %v1470 = vadd.f32 %v1375, %v1469
        %v1471 = vpop.f32.mrf.mxu0
        %v1472 = vadd.f32 %v1375, %v1471
        %1473 = vdwg.mxu0
        %v1474 = vadd.s32 %v647, 128
        %1475 = vset.pattern.permute.xlu0 2
        %1476 = vperm.xlu0 %1475, %v630
        %v1477 = vpop.permute.xlu0 %1476
        %1478 = vset.pattern.permute.xlu0 2
        %1479 = vperm.xlu0 %1478, %v631
        %v1480 = vpop.permute.xlu0 %1479
        %1481 = vset.pattern.permute.xlu0 2
        %1482 = vperm.xlu0 %1481, %v632
        %v1483 = vpop.permute.xlu0 %1482
        %1484 = vset.pattern.permute.xlu0 2
        %1485 = vperm.xlu0 %1484, %v633
        %v1486 = vpop.permute.xlu0 %1485
        %1487 = vset.pattern.permute.xlu0 2
        %1488 = vperm.xlu0 %1487, %v634
        %v1489 = vpop.permute.xlu0 %1488
        %1490 = vset.pattern.permute.xlu0 2
        %1491 = vperm.xlu0 %1490, %v635
        %v1492 = vpop.permute.xlu0 %1491
        %1493 = vset.pattern.permute.xlu0 2
        %1494 = vperm.xlu0 %1493, %v636
        %v1495 = vpop.permute.xlu0 %1494
        %1496 = vset.pattern.permute.xlu0 2
        %1497 = vperm.xlu0 %1496, %v637
        %v1498 = vpop.permute.xlu0 %1497
        %1499 = vset.pattern.permute.xlu0 2
        %1500 = vperm.xlu0 %1499, %v638
        %v1501 = vpop.permute.xlu0 %1500
        %1502 = vset.pattern.permute.xlu0 2
        %1503 = vperm.xlu0 %1502, %v639
        %v1504 = vpop.permute.xlu0 %1503
        %1505 = vset.pattern.permute.xlu0 2
        %1506 = vperm.xlu0 %1505, %v640
        %v1507 = vpop.permute.xlu0 %1506
        %1508 = vset.pattern.permute.xlu0 2
        %1509 = vperm.xlu0 %1508, %v641
        %v1510 = vpop.permute.xlu0 %1509
        %1511 = vset.pattern.permute.xlu0 2
        %1512 = vperm.xlu0 %1511, %v642
        %v1513 = vpop.permute.xlu0 %1512
        %1514 = vset.pattern.permute.xlu0 2
        %1515 = vperm.xlu0 %1514, %v643
        %v1516 = vpop.permute.xlu0 %1515
        %1517 = vset.pattern.permute.xlu0 2
        %1518 = vperm.xlu0 %1517, %v644
        %v1519 = vpop.permute.xlu0 %1518
        %1520 = vset.pattern.permute.xlu0 2
        %1521 = vperm.xlu0 %1520, %v645
        %v1522 = vpop.permute.xlu0 %1521
        %vm1523 = vcmp.eq.s32.totalorder %v647, %v1477
        %vm1524 = vcmp.eq.s32.totalorder %v1474, %v1477
        %vm1525 = vcmp.eq.s32.totalorder %v647, %v1480
        %vm1526 = vcmp.eq.s32.totalorder %v1474, %v1480
        %vm1527 = vcmp.eq.s32.totalorder %v647, %v1483
        %vm1528 = vcmp.eq.s32.totalorder %v1474, %v1483
        %vm1529 = vcmp.eq.s32.totalorder %v647, %v1486
        %vm1530 = vcmp.eq.s32.totalorder %v1474, %v1486
        %vm1531 = vcmp.eq.s32.totalorder %v647, %v1489
        %vm1532 = vcmp.eq.s32.totalorder %v1474, %v1489
        %vm1533 = vcmp.eq.s32.totalorder %v647, %v1492
        %vm1534 = vcmp.eq.s32.totalorder %v1474, %v1492
        %vm1535 = vcmp.eq.s32.totalorder %v647, %v1495
        %vm1536 = vcmp.eq.s32.totalorder %v1474, %v1495
        %vm1537 = vcmp.eq.s32.totalorder %v647, %v1498
        %vm1538 = vcmp.eq.s32.totalorder %v1474, %v1498
        %vm1539 = vcmp.eq.s32.totalorder %v647, %v1501
        %vm1540 = vcmp.eq.s32.totalorder %v1474, %v1501
        %vm1541 = vcmp.eq.s32.totalorder %v647, %v1504
        %vm1542 = vcmp.eq.s32.totalorder %v1474, %v1504
        %vm1543 = vcmp.eq.s32.totalorder %v647, %v1507
        %vm1544 = vcmp.eq.s32.totalorder %v1474, %v1507
        %vm1545 = vcmp.eq.s32.totalorder %v647, %v1510
        %vm1546 = vcmp.eq.s32.totalorder %v1474, %v1510
        %vm1547 = vcmp.eq.s32.totalorder %v647, %v1513
        %vm1548 = vcmp.eq.s32.totalorder %v1474, %v1513
        %vm1549 = vcmp.eq.s32.totalorder %v647, %v1516
        %vm1550 = vcmp.eq.s32.totalorder %v1474, %v1516
        %vm1551 = vcmp.eq.s32.totalorder %v647, %v1519
        %vm1552 = vcmp.eq.s32.totalorder %v1474, %v1519
        %vm1553 = vcmp.eq.s32.totalorder %v647, %v1522
        %vm1554 = vcmp.eq.s32.totalorder %v1474, %v1522
        %v1555 = vsel %vm1523, 1.0, 0.0
        %v1556 = vsel %vm1524, 1.0, 0.0
        %v1557 = vsel %vm1525, 1.0, 0.0
        %v1558 = vsel %vm1526, 1.0, 0.0
        %v1559 = vsel %vm1527, 1.0, 0.0
        %v1560 = vsel %vm1528, 1.0, 0.0
        %v1561 = vsel %vm1529, 1.0, 0.0
        %v1562 = vsel %vm1530, 1.0, 0.0
        %v1563 = vsel %vm1531, 1.0, 0.0
        %v1564 = vsel %vm1532, 1.0, 0.0
        %v1565 = vsel %vm1533, 1.0, 0.0
        %v1566 = vsel %vm1534, 1.0, 0.0
        %v1567 = vsel %vm1535, 1.0, 0.0
        %v1568 = vsel %vm1536, 1.0, 0.0
        %v1569 = vsel %vm1537, 1.0, 0.0
        %v1570 = vsel %vm1538, 1.0, 0.0
        %v1571 = vsel %vm1539, 1.0, 0.0
        %v1572 = vsel %vm1540, 1.0, 0.0
        %v1573 = vsel %vm1541, 1.0, 0.0
        %v1574 = vsel %vm1542, 1.0, 0.0
        %v1575 = vsel %vm1543, 1.0, 0.0
        %v1576 = vsel %vm1544, 1.0, 0.0
        %v1577 = vsel %vm1545, 1.0, 0.0
        %v1578 = vsel %vm1546, 1.0, 0.0
        %v1579 = vsel %vm1547, 1.0, 0.0
        %v1580 = vsel %vm1548, 1.0, 0.0
        %v1581 = vsel %vm1549, 1.0, 0.0
        %v1582 = vsel %vm1550, 1.0, 0.0
        %v1583 = vsel %vm1551, 1.0, 0.0
        %v1584 = vsel %vm1552, 1.0, 0.0
        %v1585 = vsel %vm1553, 1.0, 0.0
        %v1586 = vsel %vm1554, 1.0, 0.0
        %v1587 = vld [vmem:[%s14] sm:$0xff]
        %v1588 = vld [vmem:[%s14 + $0x8] sm:$0xff]
        %v1589 = vld [vmem:[%s14 + $0x10] sm:$0xff]
        %v1590 = vld [vmem:[%s14 + $0x18] sm:$0xff]
        %v1591 = vld [vmem:[%s14 + $0x20] sm:$0xff]
        %v1592 = vld [vmem:[%s14 + $0x28] sm:$0xff]
        %v1593 = vld [vmem:[%s14 + $0x30] sm:$0xff]
        %v1594 = vld [vmem:[%s14 + $0x38] sm:$0xff]
        %v1595 = vld [vmem:[%s14 + $0x40] sm:$0xff]
        %v1596 = vld [vmem:[%s14 + $0x48] sm:$0xff]
        %v1597 = vld [vmem:[%s14 + $0x50] sm:$0xff]
        %v1598 = vld [vmem:[%s14 + $0x58] sm:$0xff]
        %v1599 = vld [vmem:[%s14 + $0x60] sm:$0xff]
        %v1600 = vld [vmem:[%s14 + $0x68] sm:$0xff]
        %v1601 = vld [vmem:[%s14 + $0x70] sm:$0xff]
        %v1602 = vld [vmem:[%s14 + $0x78] sm:$0xff]
        %v1603 = vld [vmem:[%s14 + $0x80] sm:$0xff]
        %v1604 = vld [vmem:[%s14 + $0x88] sm:$0xff]
        %v1605 = vld [vmem:[%s14 + $0x90] sm:$0xff]
        %v1606 = vld [vmem:[%s14 + $0x98] sm:$0xff]
        %v1607 = vld [vmem:[%s14 + $0xa0] sm:$0xff]
        %v1608 = vld [vmem:[%s14 + $0xa8] sm:$0xff]
        %v1609 = vld [vmem:[%s14 + $0xb0] sm:$0xff]
        %v1610 = vld [vmem:[%s14 + $0xb8] sm:$0xff]
        %v1611 = vld [vmem:[%s14 + $0xc0] sm:$0xff]
        %v1612 = vld [vmem:[%s14 + $0xc8] sm:$0xff]
        %v1613 = vld [vmem:[%s14 + $0xd0] sm:$0xff]
        %v1614 = vld [vmem:[%s14 + $0xd8] sm:$0xff]
        %v1615 = vld [vmem:[%s14 + $0xe0] sm:$0xff]
        %v1616 = vld [vmem:[%s14 + $0xe8] sm:$0xff]
        %v1617 = vld [vmem:[%s14 + $0xf0] sm:$0xff]
        %v1618 = vld [vmem:[%s14 + $0xf8] sm:$0xff]
        %1619 = vmatpush.msra.mxu0 %v1602
        %1620 = vmatpush.msra.mxu0 %v1601
        %1621 = vmatpush.msra.mxu0 %v1600
        %1622 = vmatpush.msra.mxu0 %v1599
        %1623 = vmatpush.msra.mxu0 %v1598
        %1624 = vmatpush.msra.mxu0 %v1597
        %1625 = vmatpush.msra.mxu0 %v1596
        %1626 = vmatpush.msra.mxu0 %v1595
        %1627 = vmatpush.msra.mxu0 %v1594
        %1628 = vmatpush.msra.mxu0 %v1593
        %1629 = vmatpush.msra.mxu0 %v1592
        %1630 = vmatpush.msra.mxu0 %v1591
        %1631 = vmatpush.msra.mxu0 %v1590
        %1632 = vmatpush.msra.mxu0 %v1589
        %1633 = vmatpush.msra.mxu0 %v1588
        %1634 = vmatpush.msra.mxu0 %v1587
        %1635 = vmatmul.f32.gmra.mxu0 %v1555
        %v1636 = vpop.f32.mrf.mxu0
        %v1637 = vadd.f32 0.0, %v1636
        %1638 = vmatmul.f32.gmra.mxu0 %v1557
        %v1639 = vpop.f32.mrf.mxu0
        %v1640 = vadd.f32 0.0, %v1639
        %1641 = vmatmul.f32.gmra.mxu0 %v1559
        %v1642 = vpop.f32.mrf.mxu0
        %v1643 = vadd.f32 0.0, %v1642
        %1644 = vmatmul.f32.gmra.mxu0 %v1561
        %v1645 = vpop.f32.mrf.mxu0
        %v1646 = vadd.f32 0.0, %v1645
        %1647 = vmatmul.f32.gmra.mxu0 %v1563
        %v1648 = vpop.f32.mrf.mxu0
        %v1649 = vadd.f32 0.0, %v1648
        %1650 = vmatmul.f32.gmra.mxu0 %v1565
        %v1651 = vpop.f32.mrf.mxu0
        %v1652 = vadd.f32 0.0, %v1651
        %1653 = vmatmul.f32.gmra.mxu0 %v1567
        %v1654 = vpop.f32.mrf.mxu0
        %v1655 = vadd.f32 0.0, %v1654
        %1656 = vmatmul.f32.gmra.mxu0 %v1569
        %v1657 = vpop.f32.mrf.mxu0
        %v1658 = vadd.f32 0.0, %v1657
        %1659 = vmatmul.f32.gmra.mxu0 %v1571
        %v1660 = vpop.f32.mrf.mxu0
        %v1661 = vadd.f32 0.0, %v1660
        %1662 = vmatmul.f32.gmra.mxu0 %v1573
        %v1663 = vpop.f32.mrf.mxu0
        %v1664 = vadd.f32 0.0, %v1663
        %1665 = vmatmul.f32.gmra.mxu0 %v1575
        %v1666 = vpop.f32.mrf.mxu0
        %v1667 = vadd.f32 0.0, %v1666
        %1668 = vmatmul.f32.gmra.mxu0 %v1577
        %v1669 = vpop.f32.mrf.mxu0
        %v1670 = vadd.f32 0.0, %v1669
        %1671 = vmatmul.f32.gmra.mxu0 %v1579
        %v1672 = vpop.f32.mrf.mxu0
        %v1673 = vadd.f32 0.0, %v1672
        %1674 = vmatmul.f32.gmra.mxu0 %v1581
        %v1675 = vpop.f32.mrf.mxu0
        %v1676 = vadd.f32 0.0, %v1675
        %1677 = vmatmul.f32.gmra.mxu0 %v1583
        %v1678 = vpop.f32.mrf.mxu0
        %v1679 = vadd.f32 0.0, %v1678
        %1680 = vmatmul.f32.gmra.mxu0 %v1585
        %v1681 = vpop.f32.mrf.mxu0
        %v1682 = vadd.f32 0.0, %v1681
        %1683 = vdwg.mxu0
        %1684 = vmatpush.msra.mxu0 %v1618
        %1685 = vmatpush.msra.mxu0 %v1617
        %1686 = vmatpush.msra.mxu0 %v1616
        %1687 = vmatpush.msra.mxu0 %v1615
        %1688 = vmatpush.msra.mxu0 %v1614
        %1689 = vmatpush.msra.mxu0 %v1613
        %1690 = vmatpush.msra.mxu0 %v1612
        %1691 = vmatpush.msra.mxu0 %v1611
        %1692 = vmatpush.msra.mxu0 %v1610
        %1693 = vmatpush.msra.mxu0 %v1609
        %1694 = vmatpush.msra.mxu0 %v1608
        %1695 = vmatpush.msra.mxu0 %v1607
        %1696 = vmatpush.msra.mxu0 %v1606
        %1697 = vmatpush.msra.mxu0 %v1605
        %1698 = vmatpush.msra.mxu0 %v1604
        %1699 = vmatpush.msra.mxu0 %v1603
        %1700 = vmatmul.f32.gmra.mxu0 %v1556
        %v1701 = vpop.f32.mrf.mxu0
        %v1702 = vadd.f32 %v1637, %v1701
        %1703 = vmatmul.f32.gmra.mxu0 %v1558
        %v1704 = vpop.f32.mrf.mxu0
        %v1705 = vadd.f32 %v1640, %v1704
        %1706 = vmatmul.f32.gmra.mxu0 %v1560
        %v1707 = vpop.f32.mrf.mxu0
        %v1708 = vadd.f32 %v1643, %v1707
        %1709 = vmatmul.f32.gmra.mxu0 %v1562
        %v1710 = vpop.f32.mrf.mxu0
        %v1711 = vadd.f32 %v1646, %v1710
        %1712 = vmatmul.f32.gmra.mxu0 %v1564
        %v1713 = vpop.f32.mrf.mxu0
        %v1714 = vadd.f32 %v1649, %v1713
        %1715 = vmatmul.f32.gmra.mxu0 %v1566
        %v1716 = vpop.f32.mrf.mxu0
        %v1717 = vadd.f32 %v1652, %v1716
        %1718 = vmatmul.f32.gmra.mxu0 %v1568
        %v1719 = vpop.f32.mrf.mxu0
        %v1720 = vadd.f32 %v1655, %v1719
        %1721 = vmatmul.f32.gmra.mxu0 %v1570
        %v1722 = vpop.f32.mrf.mxu0
        %v1723 = vadd.f32 %v1658, %v1722
        %1724 = vmatmul.f32.gmra.mxu0 %v1572
        %v1725 = vpop.f32.mrf.mxu0
        %v1726 = vadd.f32 %v1661, %v1725
        %1727 = vmatmul.f32.gmra.mxu0 %v1574
        %v1728 = vpop.f32.mrf.mxu0
        %v1729 = vadd.f32 %v1664, %v1728
        %1730 = vmatmul.f32.gmra.mxu0 %v1576
        %v1731 = vpop.f32.mrf.mxu0
        %v1732 = vadd.f32 %v1667, %v1731
        %1733 = vmatmul.f32.gmra.mxu0 %v1578
        %v1734 = vpop.f32.mrf.mxu0
        %v1735 = vadd.f32 %v1670, %v1734
        %1736 = vmatmul.f32.gmra.mxu0 %v1580
        %v1737 = vpop.f32.mrf.mxu0
        %v1738 = vadd.f32 %v1673, %v1737
        %1739 = vmatmul.f32.gmra.mxu0 %v1582
        %v1740 = vpop.f32.mrf.mxu0
        %v1741 = vadd.f32 %v1676, %v1740
        %1742 = vmatmul.f32.gmra.mxu0 %v1584
        %v1743 = vpop.f32.mrf.mxu0
        %v1744 = vadd.f32 %v1679, %v1743
        %1745 = vmatmul.f32.gmra.mxu0 %v1586
        %v1746 = vpop.f32.mrf.mxu0
        %v1747 = vadd.f32 %v1682, %v1746
        %1748 = vdwg.mxu0
        %v1749 = vadd.f32 %v1435, %v1702
        %v1750 = vadd.f32 %v1437, %v1705
        %v1751 = vadd.f32 %v1440, %v1708
        %v1752 = vadd.f32 %v1442, %v1711
        %v1753 = vadd.f32 %v1445, %v1714
        %v1754 = vadd.f32 %v1447, %v1717
        %v1755 = vadd.f32 %v1450, %v1720
        %v1756 = vadd.f32 %v1452, %v1723
        %v1757 = vadd.f32 %v1455, %v1726
        %v1758 = vadd.f32 %v1457, %v1729
        %v1759 = vadd.f32 %v1460, %v1732
        %v1760 = vadd.f32 %v1462, %v1735
        %v1761 = vadd.f32 %v1465, %v1738
        %v1762 = vadd.f32 %v1467, %v1741
        %v1763 = vadd.f32 %v1470, %v1744
        %v1764 = vadd.f32 %v1472, %v1747
        %1765 = vst [vmem:[%s504] sm:$0xff] %v1749
        %1766 = vst [vmem:[%s504 + $0x8] sm:$0xff] %v1750
        %1767 = vst [vmem:[%s504 + $0x10] sm:$0xff] %v1751
        %1768 = vst [vmem:[%s504 + $0x18] sm:$0xff] %v1752
        %1769 = vst [vmem:[%s504 + $0x20] sm:$0xff] %v1753
        %1770 = vst [vmem:[%s504 + $0x28] sm:$0xff] %v1754
        %1771 = vst [vmem:[%s504 + $0x30] sm:$0xff] %v1755
        %1772 = vst [vmem:[%s504 + $0x38] sm:$0xff] %v1756
        %1773 = vst [vmem:[%s504 + $0x40] sm:$0xff] %v1757
        %1774 = vst [vmem:[%s504 + $0x48] sm:$0xff] %v1758
        %1775 = vst [vmem:[%s504 + $0x50] sm:$0xff] %v1759
        %1776 = vst [vmem:[%s504 + $0x58] sm:$0xff] %v1760
        %1777 = vst [vmem:[%s504 + $0x60] sm:$0xff] %v1761
        %1778 = vst [vmem:[%s504 + $0x68] sm:$0xff] %v1762
        %1779 = vst [vmem:[%s504 + $0x70] sm:$0xff] %v1763
        %1780 = vst [vmem:[%s504 + $0x78] sm:$0xff] %v1764
        %s1781 = sand.u32 %s362, 1
        %s1782 = scalar_lea.sflag [#allocation3], %s1781
        %s1783 = sand.u32 %s362, 1
        %s1784 = smul.addr %s1783, 128
        %s1785 = scalar_lea.vmem [#allocation2], %s1784
        // Predicated region
        $region81: #{tpu_custom_call.1} parent=79 // pred_check
          %p1786 = pneg %p372
        $region82: #{tpu_custom_call.1} parent=79 // pred_check_branch
          %1788 = sbr.rel (%p1786) target = $region84
        $region83: #{tpu_custom_call.1} parent=79 // pred_region
          %s1789 = smul.u32 16, %s29
          %1791 = vsyncadd %s1782, 0
          %s1792 = smul.addr %s1789, 8
          %s1793 = scalar_lea.hbm %s15, %s1792
          %s1794 = sshll.u32 %s1785, 4
          %s1795 = int_to_ptr.vmem [resolvable:$true] %s1794
          %s1796 = sshll.u32 %s1793, 4
          %s1797 = int_to_ptr.hbm [resolvable:$true] %s1796
          %1802 = dma.vmem_to_hbm [thread:$0]  %s1795, 2048, %s1797, %s1782, 128, 128, 8
        $region84: #{tpu_custom_call.1} parent=79 // pred_fallthru
          _
      $region80: #{tpu_custom_call.1} parent=5 // pred_fallthru
        _
      %p1803 = scmp.le.s32.totalorder 2, %s24
      // Predicated region
      $region85: #{tpu_custom_call.1} parent=5 // pred_check
        %p1804 = pneg %p1803
      $region86: #{tpu_custom_call.1} parent=5 // pred_check_branch
        %1806 = sbr.rel (%p1804) target = $region88
      $region87: #{tpu_custom_call.1} parent=5 // pred_region
        %s1807 = ssub.s32 %s24, 2
        // Predicated region
        $region89: #{tpu_custom_call.1} parent=87 // pred_check
          %p1808 = pneg %p378
        $region90: #{tpu_custom_call.1} parent=87 // pred_check_branch
          %1810 = sbr.rel (%p1808) target = $region92
        $region91: #{tpu_custom_call.1} parent=87 // pred_region
          %s1811 = sand.u32 %s363, 1
          %s1812 = scalar_lea.sflag [#allocation3], %s1811
          %s1813 = sand.u32 %s363, 1
          %s1814 = smul.addr %s1813, 128
          %s1815 = scalar_lea.vmem [#allocation2], %s1814
          %1817 = dma.done %s1812, 2048
        $region92: #{tpu_custom_call.1} parent=87 // pred_fallthru
          _
      $region88: #{tpu_custom_call.1} parent=5 // pred_fallthru
        _
    $region6: #{tpu_custom_call.1} parent=1 // loop_footer
      %s28 = sadd.s32 1, %s24
    $region7: #{tpu_custom_call.1} parent=1 // loop_footer_branch
      %23 = sbr.rel target = $region3
    $region8: #{tpu_custom_call.1} parent=1 // loop_exit
      _
    %1818 = vsyncpa [#allocation3], 1
    %s1819 = scalar_lea.sflag [#allocation3], 1
    %1820 = vsyncpa %s1819, 1

</llo_original>
